<compile_context>
chip_gen: v7x
topology: tpu7x:2x2x1
jax: 0.10.0
libtpu: 0.0.40
codegen_flags: <defaults>
</compile_context>

<pallas_src>
import jax
import jax.numpy as jnp
from jax.experimental import pallas as pl
from jax.experimental.pallas import tpu as pltpu

LANE = 128
SUBLANE = 8


def _round_up(x, m):
    return ((x + m - 1) // m) * m


def _pad2d(a, rows, cols):
    r, c = a.shape
    return jnp.pad(a, ((0, rows - r), (0, cols - c)))


def _full_spec(shape):
    # single-tile BlockSpec covering the whole array (block == full dims)
    return pl.BlockSpec(shape, lambda: (0,) * len(shape))


def _vmem_budget_bytes():
    # Generation-aware VMEM budget (~75% of physical, headroom for compiler
    # scratch / double buffers).  Falls back to a v7x-safe 48 MiB.
    try:
        cap = int(pltpu.get_tpu_info().vmem_capacity_bytes)
        return max(32 * 2**20, (cap * 3) // 4)
    except Exception:
        return 48 * 2**20


def _vmem_limit(footprint_bytes, budget_bytes):
    return int(min(budget_bytes, max(16 * 2**20, 2 * int(footprint_bytes))))


# ----------------------------------------------------------------------------
# Fused single-kernel path: conv stack -> pool -> fc stack -> softmax.
# Adjacency + all parameters resident in VMEM; adjacency read from HBM once.
# ----------------------------------------------------------------------------
def _make_fused_kernel(num_conv, num_fc, in_pads, out_pads, num_classes):
    def kernel(adj_ref, x_ref, assign_ref, w_ref, b_ref, out_ref):
        adj = adj_ref[...]                       # (N_pad, N_pad) bf16
        h = x_ref[...]                           # (N_pad, in_pads[0]) bf16
        li = 0

        # conv stack: h = relu((adj @ h) @ W + b), bf16 operands / f32 accum
        for _ in range(num_conv):
            ip, op = in_pads[li], out_pads[li]
            w = w_ref[li][:ip, :op]              # bf16
            b = b_ref[li][:, :op]                # f32
            ah = jnp.dot(adj, h, preferred_element_type=jnp.float32)
            y = jnp.dot(ah.astype(jnp.bfloat16), w,
                        preferred_element_type=jnp.float32) + b
            h = jnp.maximum(y, 0.0).astype(jnp.bfloat16)
            li += 1

        # global sum pool (one-hot assignment matmul)
        y = jnp.dot(assign_ref[...], h, preferred_element_type=jnp.float32)

        # fc stack
        for _ in range(num_fc):
            ip, op = in_pads[li], out_pads[li]
            w = w_ref[li][:ip, :op]
            b = b_ref[li][:, :op]
            y = jnp.dot(y.astype(jnp.bfloat16), w,
                        preferred_element_type=jnp.float32) + b
            li += 1

        # exact softmax over the real class columns only (padded lanes -> 0)
        col = jax.lax.broadcasted_iota(jnp.int32, y.shape, 1)
        y = jnp.where(col < num_classes, y, -jnp.inf)
        m = jnp.max(y, axis=-1, keepdims=True)
        e = jnp.exp(y - m)
        out_ref[...] = (e / jnp.sum(e, axis=-1, keepdims=True)).astype(out_ref.dtype)

    return kernel


# ----------------------------------------------------------------------------
# Tiled path, kernel 1: one conv layer, grid = (row tiles, k-reduction tiles).
#   acc(tm, Fin) += adj(tm, tk) @ h(tk, Fin);  at last k: relu(acc @ W + b).
# ----------------------------------------------------------------------------
def _conv_tiled_kernel(adj_ref, h_ref, w_ref, b_ref, out_ref, acc_ref):
    k = pl.program_id(1)

    @pl.when(k == 0)
    def _init():
        acc_ref[...] = jnp.zeros_like(acc_ref)

    acc_ref[...] += jnp.dot(adj_ref[...], h_ref[...],
                            preferred_element_type=jnp.float32)

    @pl.when(k == pl.num_programs(1) - 1)
    def _finalize():
        y = jnp.dot(acc_ref[...].astype(jnp.bfloat16), w_ref[...],
                    preferred_element_type=jnp.float32) + b_ref[...]
        out_ref[...] = jnp.maximum(y, 0.0).astype(out_ref.dtype)


# ----------------------------------------------------------------------------
# Tiled path, kernel 2: global sum pool (k-tiled over nodes) + fc + softmax.
# ----------------------------------------------------------------------------
def _make_pool_fc_kernel(num_fc, fc_in_pads, fc_out_pads, num_classes):
    def kernel(assign_ref, h_ref, w_ref, b_ref, out_ref, acc_ref):
        k = pl.program_id(0)

        @pl.when(k == 0)
        def _init():
            acc_ref[...] = jnp.zeros_like(acc_ref)

        acc_ref[...] += jnp.dot(assign_ref[...], h_ref[...],
                                preferred_element_type=jnp.float32)

        @pl.when(k == pl.num_programs(0) - 1)
        def _finalize():
            y = acc_ref[...]
            for li in range(num_fc):
                ip, op = fc_in_pads[li], fc_out_pads[li]
                w = w_ref[li][:ip, :op]
                b = b_ref[li][:, :op]
                y = jnp.dot(y.astype(jnp.bfloat16), w,
                            preferred_element_type=jnp.float32) + b
            col = jax.lax.broadcasted_iota(jnp.int32, y.shape, 1)
            y = jnp.where(col < num_classes, y, -jnp.inf)
            m = jnp.max(y, axis=-1, keepdims=True)
            e = jnp.exp(y - m)
            out_ref[...] = (e / jnp.sum(e, axis=-1, keepdims=True)).astype(out_ref.dtype)

    return kernel


# ----------------------------------------------------------------------------
# Module wrapper
# ----------------------------------------------------------------------------
class GraphSparseNodeOnlyPallas:
    def __init__(self, input_features, num_conv_layers, conv_output_dims,
                 num_fc_layers, fc_output_dims, key):
        assert num_conv_layers == len(conv_output_dims)
        assert num_fc_layers == len(fc_output_dims)
        self.input_features = input_features
        self.num_conv = num_conv_layers
        self.num_fc = num_fc_layers
        self.conv_output_dims = list(conv_output_dims)
        self.fc_output_dims = list(fc_output_dims)
        self.num_classes = fc_output_dims[-1]

        conv_in_dims = [input_features] + list(conv_output_dims[:-1])
        fc_in_dims = [conv_output_dims[-1]] + list(fc_output_dims[:-1])

        # per-layer padded (lane-dense) widths
        self._conv_in_pads = [_round_up(d, LANE) for d in conv_in_dims]
        self._conv_out_pads = [_round_up(d, LANE) for d in conv_output_dims]
        self._fc_in_pads = [_round_up(d, LANE) for d in fc_in_dims]
        self._fc_out_pads = [_round_up(d, LANE) for d in fc_output_dims]
        self._all_in_pads = self._conv_in_pads + self._fc_in_pads
        self._all_out_pads = self._conv_out_pads + self._fc_out_pads
        self._Fmax = max(self._all_in_pads + self._all_out_pads)
        self._Ffc = max(self._fc_in_pads + self._fc_out_pads)

        # ---- parameters (torch.nn.Linear-style init), kept unpadded in f32 ----
        self.conv_params, self.fc_params = [], []
        in_dim = input_features
        for i, out_dim in enumerate(conv_output_dims):
            kw, kb = jax.random.split(jax.random.fold_in(key, i))
            s = 1.0 / jnp.sqrt(in_dim)
            w = jax.random.uniform(kw, (in_dim, out_dim), jnp.float32, -s, s)
            b = jax.random.uniform(kb, (1, out_dim), jnp.float32, -s, s)
            self.conv_params.append((w, b))
            in_dim = out_dim
        in_dim = conv_output_dims[-1]
        for i, out_dim in enumerate(fc_output_dims):
            kw, kb = jax.random.split(jax.random.fold_in(key, 1000 + i))
            s = 1.0 / jnp.sqrt(in_dim)
            w = jax.random.uniform(kw, (in_dim, out_dim), jnp.float32, -s, s)
            b = jax.random.uniform(kb, (1, out_dim), jnp.float32, -s, s)
            self.fc_params.append((w, b))
            in_dim = out_dim

        all_params = self.conv_params + self.fc_params

        # packed slabs for the fused path: bf16 weights, f32 biases
        self._w_slab = jnp.stack(
            [_pad2d(w, self._Fmax, self._Fmax) for w, _ in all_params]
        ).astype(jnp.bfloat16)                               # (L, Fmax, Fmax)
        self._b_slab = jnp.stack(
            [_pad2d(b, 1, self._Fmax) for _, b in all_params])   # (L, 1, Fmax) f32

        # per-layer padded conv params + packed fc slabs for the tiled path
        self._conv_w_pad = [
            _pad2d(w, self._conv_in_pads[i], self._conv_out_pads[i]).astype(jnp.bfloat16)
            for i, (w, _) in enumerate(self.conv_params)]
        self._conv_b_pad = [
            _pad2d(b, 1, self._conv_out_pads[i])
            for i, (_, b) in enumerate(self.conv_params)]
        self._fc_w_slab = jnp.stack(
            [_pad2d(w, self._Ffc, self._Ffc) for w, _ in self.fc_params]
        ).astype(jnp.bfloat16)                               # (num_fc, Ffc, Ffc)
        self._fc_b_slab = jnp.stack(
            [_pad2d(b, 1, self._Ffc) for _, b in self.fc_params])  # (num_fc, 1, Ffc)

        self._fused_kernel = _make_fused_kernel(
            self.num_conv, self.num_fc, self._all_in_pads, self._all_out_pads,
            self.num_classes)
        self._pool_fc_kernel = _make_pool_fc_kernel(
            self.num_fc, self._fc_in_pads, self._fc_out_pads, self.num_classes)

        self._vmem_budget = _vmem_budget_bytes()

    # ------------------------------------------------------------------ call
    def __call__(self, node_attr, node_mask, batch_assign, *,
                 force_tiled=False, tm=None, tk=None):
        N = node_attr.shape[0]
        B = batch_assign.shape[0]
        N_pad = _round_up(N, LANE)        # lane-dense adjacency / contraction K
        B_pad = _round_up(B, SUBLANE)

        # bf16 operands (0/1 adjacency & assignment are exact); zero padding is
        # exact (padded node rows/cols are excluded by zero adjacency/assignment
        # columns, padded weight rows/cols and bias cols are zero).
        adj_p = _pad2d(node_mask.astype(jnp.float32), N_pad, N_pad).astype(jnp.bfloat16)
        x_p = _pad2d(node_attr.astype(jnp.float32), N_pad,
                     self._conv_in_pads[0]).astype(jnp.bfloat16)
        assign_p = _pad2d(batch_assign.astype(jnp.float32), B_pad,
                          N_pad).astype(jnp.bfloat16)

        fused_footprint = (
            adj_p.size * 2 + x_p.size * 2 + assign_p.size * 2 +
            self._w_slab.size * 2 + self._b_slab.size * 4 +
            B_pad * self._all_out_pads[-1] * 4 +
            3 * N_pad * self._Fmax * 4)           # live f32 intermediates
        if force_tiled or (fused_footprint * 5) // 4 > self._vmem_budget:
            return self._forward_tiled(adj_p, x_p, assign_p, B, N_pad, B_pad, tm, tk)
        return self._forward_fused(adj_p, x_p, assign_p, B, B_pad, fused_footprint)

    # ----------------------------------------------------------- fused path
    def _forward_fused(self, adj_p, x_p, assign_p, B, B_pad, footprint):
        out_shape = (B_pad, self._all_out_pads[-1])
        inputs = [adj_p, x_p, assign_p, self._w_slab, self._b_slab]
        out = pl.pallas_call(
            self._fused_kernel,
            out_shape=jax.ShapeDtypeStruct(out_shape, jnp.float32),
            in_specs=[_full_spec(a.shape) for a in inputs],
            out_specs=_full_spec(out_shape),
            compiler_params=pltpu.CompilerParams(
                vmem_limit_bytes=_vmem_limit(footprint, self._vmem_budget)),
        )(*inputs)
        return out[:B, :self.num_classes]

    # ----------------------------------------------------------- tiled path
    def _forward_tiled(self, adj_p, x_p, assign_p, B, N_pad, B_pad, tm, tk):
        # Tile defaults sized for the smallest-VMEM generation (v7x, 64 MiB);
        # 256-aligned tiles also fill the v6e/v7x 256-wide MXU.  All tiles
        # divide N_pad (a 128 multiple), so no remainder handling is needed.
        if tm is None:
            tm = 256 if N_pad % 256 == 0 else 128
        if tk is None:
            tk = 512 if N_pad % 512 == 0 else (256 if N_pad % 256 == 0 else 128)
        assert N_pad % tm == 0 and N_pad % tk == 0

        h = x_p
        for li in range(self.num_conv):
            ip, op = self._conv_in_pads[li], self._conv_out_pads[li]
            w, b = self._conv_w_pad[li], self._conv_b_pad[li]
            footprint = (2 * (tm * tk * 2 + tk * ip * 2 + ip * op * 2 +
                              op * 4 + tm * op * 2) + tm * ip * 4)
            h = pl.pallas_call(
                _conv_tiled_kernel,
                out_shape=jax.ShapeDtypeStruct((N_pad, op), jnp.bfloat16),
                grid_spec=pltpu.PrefetchScalarGridSpec(
                    num_scalar_prefetch=0,
                    grid=(N_pad // tm, N_pad // tk),
                    in_specs=[
                        pl.BlockSpec((tm, tk), lambda i, k: (i, k)),   # adj tile
                        pl.BlockSpec((tk, ip), lambda i, k: (k, 0)),   # node feats
                        pl.BlockSpec((ip, op), lambda i, k: (0, 0)),   # W
                        pl.BlockSpec((1, op), lambda i, k: (0, 0)),    # bias
                    ],
                    out_specs=pl.BlockSpec((tm, op), lambda i, k: (i, 0)),
                    scratch_shapes=[pltpu.VMEM((tm, ip), jnp.float32)],
                ),
                compiler_params=pltpu.CompilerParams(
                    dimension_semantics=("parallel", "arbitrary"),
                    vmem_limit_bytes=_vmem_limit(footprint, self._vmem_budget)),
            )(adj_p, h, w, b)

        # pool (k-tiled over nodes) + fc + softmax epilogue
        fin0 = self._fc_in_pads[0]
        out_pad = self._fc_out_pads[-1]
        footprint = (2 * (B_pad * tk * 2 + tk * fin0 * 2 +
                          self._fc_w_slab.size * 2 + self._fc_b_slab.size * 4 +
                          B_pad * out_pad * 4) + B_pad * fin0 * 4)
        out = pl.pallas_call(
            self._pool_fc_kernel,
            out_shape=jax.ShapeDtypeStruct((B_pad, out_pad), jnp.float32),
            grid_spec=pltpu.PrefetchScalarGridSpec(
                num_scalar_prefetch=0,
                grid=(N_pad // tk,),
                in_specs=[
                    pl.BlockSpec((B_pad, tk), lambda k: (0, k)),       # assignment
                    pl.BlockSpec((tk, fin0), lambda k: (k, 0)),        # node feats
                    pl.BlockSpec(self._fc_w_slab.shape, lambda k: (0, 0, 0)),
                    pl.BlockSpec(self._fc_b_slab.shape, lambda k: (0, 0, 0)),
                ],
                out_specs=pl.BlockSpec((B_pad, out_pad), lambda k: (0, 0)),
                scratch_shapes=[pltpu.VMEM((B_pad, fin0), jnp.float32)],
            ),
            compiler_params=pltpu.CompilerParams(
                dimension_semantics=("arbitrary",),
                vmem_limit_bytes=_vmem_limit(footprint, self._vmem_budget)),
        )(assign_p, h, self._fc_w_slab, self._fc_b_slab)
        return out[:B, :self.num_classes]

    # ------------------------------------------------------------ references
    def reference(self, node_attr, node_mask, batch_assign):
        # pure-f32 module reference
        h = node_attr
        for w, b in self.conv_params:
            h = jnp.maximum((node_mask @ h) @ w + b, 0.0)
        y = batch_assign @ h
        for w, b in self.fc_params:
            y = y @ w + b
        return jax.nn.softmax(y, axis=1)

    def reference_bf16(self, node_attr, node_mask, batch_assign):
        # quantization-matched reference (same bf16 operand / f32 accum recipe)
        bf, f32 = jnp.bfloat16, jnp.float32
        adj = node_mask.astype(bf)
        h = node_attr.astype(bf)
        for w, b in self.conv_params:
            ah = jnp.dot(adj, h, preferred_element_type=f32)
            y = jnp.dot(ah.astype(bf), w.astype(bf), preferred_element_type=f32) + b
            h = jnp.maximum(y, 0.0).astype(bf)
        y = jnp.dot(batch_assign.astype(bf), h, preferred_element_type=f32)
        for w, b in self.fc_params:
            y = jnp.dot(y.astype(bf), w.astype(bf), preferred_element_type=f32) + b
        return jax.nn.softmax(y, axis=1)


# ----------------------------------------------------------------------------
# Demo
# ----------------------------------------------------------------------------
if __name__ == "__main__":
    key = jax.random.PRNGKey(0)

    num_graphs = 8
    nodes_per_graph = 20
    N = num_graphs * nodes_per_graph          # 160 nodes -> N_pad = 256
    input_features = 8
    conv_output_dims = [32, 32]
    fc_output_dims = [16, 4]

    k_x, k_a = jax.random.split(key, 2)

    node_attr = 0.25 * jax.random.normal(k_x, (N, input_features), jnp.float32)

    # block-diagonal sparse random adjacency with self loops
    graph_id = jnp.repeat(jnp.arange(num_graphs, dtype=jnp.int32), nodes_per_graph)
    same_graph = (graph_id[:, None] == graph_id[None, :]).astype(jnp.float32)
    adj_raw = (jax.random.uniform(k_a, (N, N)) < 0.15).astype(jnp.float32)
    node_mask = jnp.maximum(adj_raw * same_graph, jnp.eye(N, dtype=jnp.float32))

    # batching -> one-hot assignment matrix [B, N]
    batch_assign = (graph_id[None, :] == jnp.arange(num_graphs)[:, None]).astype(jnp.float32)

    model = GraphSparseNodeOnlyPallas(
        input_features=input_features,
        num_conv_layers=len(conv_output_dims),
        conv_output_dims=conv_output_dims,
        num_fc_layers=len(fc_output_dims),
        fc_output_dims=fc_output_dims,
        key=jax.random.fold_in(key, 1234),
    )

    # Fused single-kernel path (auto-selected: whole working set fits in VMEM).
    out_fused = model(node_attr, node_mask, batch_assign)
    # Tiled path with a real (row, k-reduction) grid: 256/128 -> grid (2, 2).
    out_tiled = model(node_attr, node_mask, batch_assign,
                      force_tiled=True, tm=128, tk=128)
    out_fused, out_tiled = jax.block_until_ready((out_fused, out_tiled))

    assert out_fused.shape == (num_graphs, fc_output_dims[-1])
    assert out_tiled.shape == (num_graphs, fc_output_dims[-1])

    ref_bf16 = model.reference_bf16(node_attr, node_mask, batch_assign)
    ref_f32 = model.reference(node_attr, node_mask, batch_assign)

    # tight: same bf16-operand / f32-accumulate recipe, only reduction order differs
    assert jnp.allclose(out_fused, ref_bf16, atol=5e-3), "fused vs bf16 reference"
    assert jnp.allclose(out_tiled, ref_bf16, atol=5e-3), "tiled vs bf16 reference"
    assert jnp.allclose(out_fused, out_tiled, atol=5e-3), "fused vs tiled"
    # loose: bf16 pipeline vs pure-f32 module reference
    assert jnp.allclose(out_fused, ref_f32, atol=0.15), "fused vs f32 reference"
    # softmax rows are valid probability distributions
    assert jnp.allclose(jnp.sum(out_fused, axis=1), jnp.ones(num_graphs), atol=1e-5)

    print("KERNEL_OK")
</pallas_src>

<mosaic_0001>
module attributes {stable_mosaic.version = 11 : i64} {
  func.func @kernel(%arg0: memref<256x256xbf16, #tpu.memory_space<vmem>>, %arg1: memref<256x128xbf16, #tpu.memory_space<vmem>>, %arg2: memref<8x256xbf16, #tpu.memory_space<vmem>>, %arg3: memref<4x128x128xbf16, #tpu.memory_space<vmem>>, %arg4: memref<4x1x128xf32, #tpu.memory_space<vmem>>, %arg5: memref<8x128xf32, #tpu.memory_space<vmem>>) attributes {dimension_semantics = [], scalar_prefetch = 0 : i64, scratch_operands = 0 : i64, tpu.core_type = #tpu.core_type<tc>} {
    %c0 = arith.constant 0 : index
    %c0_0 = arith.constant 0 : index
    %0 = vector.load %arg0[%c0, %c0_0] : memref<256x256xbf16, #tpu.memory_space<vmem>>, vector<256x256xbf16>
    %c0_1 = arith.constant 0 : index
    %c0_2 = arith.constant 0 : index
    %1 = vector.load %arg1[%c0_1, %c0_2] : memref<256x128xbf16, #tpu.memory_space<vmem>>, vector<256x128xbf16>
    %c0_3 = arith.constant 0 : index
    %c0_4 = arith.constant 0 : index
    %c0_5 = arith.constant 0 : index
    %2 = vector.load %arg3[%c0_3, %c0_4, %c0_5] : memref<4x128x128xbf16, #tpu.memory_space<vmem>>, vector<1x128x128xbf16>
    %3 = vector.shape_cast %2 : vector<1x128x128xbf16> to vector<128x128xbf16>
    %c0_6 = arith.constant 0 : index
    %c0_7 = arith.constant 0 : index
    %c0_8 = arith.constant 0 : index
    %4 = vector.load %arg4[%c0_6, %c0_7, %c0_8] : memref<4x1x128xf32, #tpu.memory_space<vmem>>, vector<1x1x128xf32>
    %5 = vector.shape_cast %4 : vector<1x1x128xf32> to vector<1x128xf32>
    %cst = arith.constant dense<0.000000e+00> : vector<256x128xf32>
    %6 = tpu.matmul %0, %1, %cst {dimension_numbers = #tpu.dot_dimension_numbers<[1], [0], [0], [1], [0, 0, 1, 1], [], []>} : vector<256x256xbf16>, vector<256x128xbf16>, vector<256x128xf32> -> vector<256x128xf32>
    %7 = arith.truncf %6 : vector<256x128xf32> to vector<256x128xbf16>
    %cst_9 = arith.constant dense<0.000000e+00> : vector<256x128xf32>
    %8 = tpu.matmul %7, %3, %cst_9 {dimension_numbers = #tpu.dot_dimension_numbers<[1], [0], [0], [1], [0, 0, 1, 1], [], []>} : vector<256x128xbf16>, vector<128x128xbf16>, vector<256x128xf32> -> vector<256x128xf32>
    %9 = vector.broadcast %5 : vector<1x128xf32> to vector<256x128xf32>
    %10 = arith.addf %8, %9 : vector<256x128xf32>
    %cst_10 = arith.constant 0.000000e+00 : f32
    %11 = vector.broadcast %cst_10 : f32 to vector<256x128xf32>
    %12 = arith.maximumf %10, %11 : vector<256x128xf32>
    %13 = arith.truncf %12 : vector<256x128xf32> to vector<256x128xbf16>
    %c1 = arith.constant 1 : index
    %c0_11 = arith.constant 0 : index
    %c0_12 = arith.constant 0 : index
    %14 = vector.load %arg3[%c1, %c0_11, %c0_12] : memref<4x128x128xbf16, #tpu.memory_space<vmem>>, vector<1x128x128xbf16>
    %15 = vector.shape_cast %14 : vector<1x128x128xbf16> to vector<128x128xbf16>
    %c1_13 = arith.constant 1 : index
    %c0_14 = arith.constant 0 : index
    %c0_15 = arith.constant 0 : index
    %16 = vector.load %arg4[%c1_13, %c0_14, %c0_15] : memref<4x1x128xf32, #tpu.memory_space<vmem>>, vector<1x1x128xf32>
    %17 = vector.shape_cast %16 : vector<1x1x128xf32> to vector<1x128xf32>
    %cst_16 = arith.constant dense<0.000000e+00> : vector<256x128xf32>
    %18 = tpu.matmul %0, %13, %cst_16 {dimension_numbers = #tpu.dot_dimension_numbers<[1], [0], [0], [1], [0, 0, 1, 1], [], []>} : vector<256x256xbf16>, vector<256x128xbf16>, vector<256x128xf32> -> vector<256x128xf32>
    %19 = arith.truncf %18 : vector<256x128xf32> to vector<256x128xbf16>
    %cst_17 = arith.constant dense<0.000000e+00> : vector<256x128xf32>
    %20 = tpu.matmul %19, %15, %cst_17 {dimension_numbers = #tpu.dot_dimension_numbers<[1], [0], [0], [1], [0, 0, 1, 1], [], []>} : vector<256x128xbf16>, vector<128x128xbf16>, vector<256x128xf32> -> vector<256x128xf32>
    %21 = vector.broadcast %17 : vector<1x128xf32> to vector<256x128xf32>
    %22 = arith.addf %20, %21 : vector<256x128xf32>
    %cst_18 = arith.constant 0.000000e+00 : f32
    %23 = vector.broadcast %cst_18 : f32 to vector<256x128xf32>
    %24 = arith.maximumf %22, %23 : vector<256x128xf32>
    %25 = arith.truncf %24 : vector<256x128xf32> to vector<256x128xbf16>
    %c0_19 = arith.constant 0 : index
    %c0_20 = arith.constant 0 : index
    %26 = vector.load %arg2[%c0_19, %c0_20] : memref<8x256xbf16, #tpu.memory_space<vmem>>, vector<8x256xbf16>
    %cst_21 = arith.constant dense<0.000000e+00> : vector<8x128xf32>
    %27 = tpu.matmul %26, %25, %cst_21 {dimension_numbers = #tpu.dot_dimension_numbers<[1], [0], [0], [1], [0, 0, 1, 1], [], []>} : vector<8x256xbf16>, vector<256x128xbf16>, vector<8x128xf32> -> vector<8x128xf32>
    %c2 = arith.constant 2 : index
    %c0_22 = arith.constant 0 : index
    %c0_23 = arith.constant 0 : index
    %28 = vector.load %arg3[%c2, %c0_22, %c0_23] : memref<4x128x128xbf16, #tpu.memory_space<vmem>>, vector<1x128x128xbf16>
    %29 = vector.shape_cast %28 : vector<1x128x128xbf16> to vector<128x128xbf16>
    %c2_24 = arith.constant 2 : index
    %c0_25 = arith.constant 0 : index
    %c0_26 = arith.constant 0 : index
    %30 = vector.load %arg4[%c2_24, %c0_25, %c0_26] : memref<4x1x128xf32, #tpu.memory_space<vmem>>, vector<1x1x128xf32>
    %31 = vector.shape_cast %30 : vector<1x1x128xf32> to vector<1x128xf32>
    %32 = arith.truncf %27 : vector<8x128xf32> to vector<8x128xbf16>
    %cst_27 = arith.constant dense<0.000000e+00> : vector<8x128xf32>
    %33 = tpu.matmul %32, %29, %cst_27 {dimension_numbers = #tpu.dot_dimension_numbers<[1], [0], [0], [1], [0, 0, 1, 1], [], []>} : vector<8x128xbf16>, vector<128x128xbf16>, vector<8x128xf32> -> vector<8x128xf32>
    %34 = vector.broadcast %31 : vector<1x128xf32> to vector<8x128xf32>
    %35 = arith.addf %33, %34 : vector<8x128xf32>
    %c3 = arith.constant 3 : index
    %c0_28 = arith.constant 0 : index
    %c0_29 = arith.constant 0 : index
    %36 = vector.load %arg3[%c3, %c0_28, %c0_29] : memref<4x128x128xbf16, #tpu.memory_space<vmem>>, vector<1x128x128xbf16>
    %37 = vector.shape_cast %36 : vector<1x128x128xbf16> to vector<128x128xbf16>
    %c3_30 = arith.constant 3 : index
    %c0_31 = arith.constant 0 : index
    %c0_32 = arith.constant 0 : index
    %38 = vector.load %arg4[%c3_30, %c0_31, %c0_32] : memref<4x1x128xf32, #tpu.memory_space<vmem>>, vector<1x1x128xf32>
    %39 = vector.shape_cast %38 : vector<1x1x128xf32> to vector<1x128xf32>
    %40 = arith.truncf %35 : vector<8x128xf32> to vector<8x128xbf16>
    %cst_33 = arith.constant dense<0.000000e+00> : vector<8x128xf32>
    %41 = tpu.matmul %40, %37, %cst_33 {dimension_numbers = #tpu.dot_dimension_numbers<[1], [0], [0], [1], [0, 0, 1, 1], [], []>} : vector<8x128xbf16>, vector<128x128xbf16>, vector<8x128xf32> -> vector<8x128xf32>
    %42 = vector.broadcast %39 : vector<1x128xf32> to vector<8x128xf32>
    %43 = arith.addf %41, %42 : vector<8x128xf32>
    %44 = tpu.iota {dimensions = array<i32: 1>} : vector<8x128xi32>
    %c4_i32 = arith.constant 4 : i32
    %45 = vector.broadcast %c4_i32 : i32 to vector<8x128xi32>
    %46 = arith.cmpi slt, %44, %45 : vector<8x128xi32>
    %cst_34 = arith.constant 0xFF800000 : f32
    %47 = vector.broadcast %cst_34 : f32 to vector<8x128xf32>
    %48 = arith.select %46, %43, %47 : vector<8x128xi1>, vector<8x128xf32>
    %cst_35 = arith.constant dense<0xFF800000> : vector<8xf32>
    %49 = vector.multi_reduction <maximumf>, %48, %cst_35 [1] : vector<8x128xf32> to vector<8xf32>
    %50 = vector.shape_cast %49 : vector<8xf32> to vector<8x1xf32>
    %51 = vector.broadcast %50 : vector<8x1xf32> to vector<8x128xf32>
    %52 = arith.subf %48, %51 : vector<8x128xf32>
    %53 = math.exp %52 : vector<8x128xf32>
    %cst_36 = arith.constant dense<0.000000e+00> : vector<8xf32>
    %54 = vector.multi_reduction <add>, %53, %cst_36 [1] : vector<8x128xf32> to vector<8xf32>
    %55 = vector.shape_cast %54 : vector<8xf32> to vector<8x1xf32>
    %56 = vector.broadcast %55 : vector<8x1xf32> to vector<8x128xf32>
    %57 = arith.divf %53, %56 : vector<8x128xf32>
    %c0_37 = arith.constant 0 : index
    %c0_38 = arith.constant 0 : index
    %58 = vector.load %arg5[%c0_37, %c0_38] : memref<8x128xf32, #tpu.memory_space<vmem>>, vector<8x128xf32>
    tpu.vector_store %arg5[%c0_37, %c0_38], %57 {strides = array<i32>} : memref<8x128xf32, #tpu.memory_space<vmem>>, vector<8x128xf32>,
    return
  }
}

</mosaic_0001>

<llo_original>
// kernel: tpu_custom_call.1
$region0: #{tpu_custom_call.1}
  #allocation0 [shape = 'u32[]', space=smem, size = 0x4, offset = 0x4, fixed_abs, tag = 'smem constant byte address 0x4 - core index']
  #allocation1 [shape = 'u32[144,128]{1,0:T(1,128)}', space=vmem, size = 0x12000, scoped, tag = 'internal scratch']
  %s0 = inlined_call_operand.hbm [shape: bf16[256,256], index: 0, kind: input, shape index: {}]
  %s1 = inlined_call_operand.hbm [shape: bf16[256,128], index: 1, kind: input, shape index: {}]
  %s2 = inlined_call_operand.hbm [shape: bf16[8,256], index: 2, kind: input, shape index: {}]
  %s3 = inlined_call_operand.hbm [shape: bf16[4,128,128], index: 3, kind: input, shape index: {}]
  %s4 = inlined_call_operand.vmem [shape: f32[4,1,128], index: 4, kind: input, shape index: {}]
  %s5 = inlined_call_operand.hbm [shape: f32[8,128], index: 5, kind: output, shape index: {}]
  %s6 = sld [smem:[#allocation0]]
  $region46: #{tpu_custom_call.1} parent=0
    _
  %s8 = ssub.s32 1, %s6
  %s9 = scalar_select 0, %s8, %s6
  $region1: #{tpu_custom_call.1} parent=0
    #allocation2 [shape = 'u8[131072]{0}', space=vmem, size = 0x20000, scoped, tag = 'input window, operand 0, single buffered']
    #allocation3 [shape = 's32[1]{0}', space=sflag, size = 0x4, scoped, tag = 'scoped memory for tpu_custom_call.1']
    #allocation4 [shape = 's32[1]{0}', space=sflag, size = 0x4, scoped, tag = 'scoped memory for tpu_custom_call.1']
    #allocation5 [shape = 'u8[65536]{0}', space=vmem, size = 0x10000, scoped, tag = 'input window, operand 1, single buffered']
    #allocation6 [shape = 's32[1]{0}', space=sflag, size = 0x4, scoped, tag = 'scoped memory for tpu_custom_call.1']
    #allocation7 [shape = 'u8[4096]{0}', space=vmem, size = 0x1000, scoped, tag = 'input window, operand 2, single buffered']
    #allocation8 [shape = 'u8[131072]{0}', space=vmem, size = 0x20000, scoped, tag = 'input window, operand 3, single buffered']
    #allocation9 [shape = 's32[1]{0}', space=sflag, size = 0x4, scoped, tag = 'scoped memory for tpu_custom_call.1']
    #allocation10 [shape = 'u8[4096]{0}', space=vmem, size = 0x1000, scoped, tag = 'output window, operand 0, single buffered']
    %10 = vsyncpa [#allocation3], 0
    %11 = vsyncpa [#allocation6], 0
    %12 = vsyncpa [#allocation9], 0
    %13 = vsyncpa [#allocation4], 0
    // Predicated region
    $region2: #{tpu_custom_call.1} parent=1 // pred_check
      _
    $region3: #{tpu_custom_call.1} parent=1 // pred_check_branch
      %15 = sbr.rel (0) target = $region5
    $region4: #{tpu_custom_call.1} parent=1 // pred_region
      %s17 = ssub.s32 4096, 4096
      %18 = vsyncadd [#allocation3], %s17
      %s19 = sshll.u32 [#allocation2], 4
      %s20 = int_to_ptr.vmem [resolvable:$true] %s19
      %25 = dma.hbm_to_vmem [thread:$0]  %s0, 4096, %s20, [#allocation3], 128, 128, 8
    $region5: #{tpu_custom_call.1} parent=1 // pred_fallthru
      _
    // Predicated region
    $region6: #{tpu_custom_call.1} parent=1 // pred_check
      _
    $region7: #{tpu_custom_call.1} parent=1 // pred_check_branch
      %27 = sbr.rel (0) target = $region9
    $region8: #{tpu_custom_call.1} parent=1 // pred_region
      %s29 = ssub.s32 2048, 2048
      %30 = vsyncadd [#allocation6], %s29
      %s31 = sshll.u32 [#allocation5], 4
      %s32 = int_to_ptr.vmem [resolvable:$true] %s31
      %37 = dma.hbm_to_vmem [thread:$0]  %s1, 2048, %s32, [#allocation6], 64, 64, 4
    $region9: #{tpu_custom_call.1} parent=1 // pred_fallthru
      _
    // Predicated region
    $region10: #{tpu_custom_call.1} parent=1 // pred_check
      _
    $region11: #{tpu_custom_call.1} parent=1 // pred_check_branch
      %39 = sbr.rel (0) target = $region13
    $region12: #{tpu_custom_call.1} parent=1 // pred_region
      %s41 = ssub.s32 128, 128
      %42 = vsyncadd [#allocation6], %s41
      %s44 = sshll.u32 [#allocation7], 4
      %s45 = int_to_ptr.vmem [resolvable:$true] %s44
      %47 = dma.hbm_to_vmem [thread:$0]  %s2, 128, %s45, [#allocation6]
    $region13: #{tpu_custom_call.1} parent=1 // pred_fallthru
      _
    // Predicated region
    $region14: #{tpu_custom_call.1} parent=1 // pred_check
      _
    $region15: #{tpu_custom_call.1} parent=1 // pred_check_branch
      %49 = sbr.rel (0) target = $region17
    $region16: #{tpu_custom_call.1} parent=1 // pred_region
      %s51 = ssub.s32 4096, 4096
      %52 = vsyncadd [#allocation9], %s51
      %s53 = sshll.u32 [#allocation8], 4
      %s54 = int_to_ptr.vmem [resolvable:$true] %s53
      %59 = dma.hbm_to_vmem [thread:$0]  %s3, 4096, %s54, [#allocation9], 64, 64, 4
    $region17: #{tpu_custom_call.1} parent=1 // pred_fallthru
      _
    // Predicated region
    $region18: #{tpu_custom_call.1} parent=1 // pred_check
      _
    $region19: #{tpu_custom_call.1} parent=1 // pred_check_branch
      %61 = sbr.rel (0) target = $region21
    $region20: #{tpu_custom_call.1} parent=1 // pred_region
      _
    $region21: #{tpu_custom_call.1} parent=1 // pred_fallthru
      _
    // Predicated region
    $region22: #{tpu_custom_call.1} parent=1 // pred_check
      _
    $region23: #{tpu_custom_call.1} parent=1 // pred_check_branch
      %63 = sbr.rel (0) target = $region25
    $region24: #{tpu_custom_call.1} parent=1 // pred_region
      %64 = dma.done [#allocation3], 4096
    $region25: #{tpu_custom_call.1} parent=1 // pred_fallthru
      _
    // Predicated region
    $region26: #{tpu_custom_call.1} parent=1 // pred_check
      _
    $region27: #{tpu_custom_call.1} parent=1 // pred_check_branch
      %66 = sbr.rel (0) target = $region29
    $region28: #{tpu_custom_call.1} parent=1 // pred_region
      %67 = dma.done [#allocation6], 2048
    $region29: #{tpu_custom_call.1} parent=1 // pred_fallthru
      _
    // Predicated region
    $region30: #{tpu_custom_call.1} parent=1 // pred_check
      _
    $region31: #{tpu_custom_call.1} parent=1 // pred_check_branch
      %69 = sbr.rel (0) target = $region33
    $region32: #{tpu_custom_call.1} parent=1 // pred_region
      %70 = dma.done [#allocation6], 128
    $region33: #{tpu_custom_call.1} parent=1 // pred_fallthru
      _
    // Predicated region
    $region34: #{tpu_custom_call.1} parent=1 // pred_check
      _
    $region35: #{tpu_custom_call.1} parent=1 // pred_check_branch
      %72 = sbr.rel (0) target = $region37
    $region36: #{tpu_custom_call.1} parent=1 // pred_region
      %73 = dma.done [#allocation9], 4096
    $region37: #{tpu_custom_call.1} parent=1 // pred_fallthru
      _
    %v75 = vld [vmem:[#allocation2] sm:$0xff]
    %v76 = vld [vmem:[#allocation2 + $0x8] sm:$0xff]
    %v77 = vld [vmem:[#allocation2 + $0x10] sm:$0xff]
    %v78 = vld [vmem:[#allocation2 + $0x18] sm:$0xff]
    %v79 = vld [vmem:[#allocation2 + $0x20] sm:$0xff]
    %v80 = vld [vmem:[#allocation2 + $0x28] sm:$0xff]
    %v81 = vld [vmem:[#allocation2 + $0x30] sm:$0xff]
    %v82 = vld [vmem:[#allocation2 + $0x38] sm:$0xff]
    %v83 = vld [vmem:[#allocation2 + $0x40] sm:$0xff]
    %v84 = vld [vmem:[#allocation2 + $0x48] sm:$0xff]
    %v85 = vld [vmem:[#allocation2 + $0x50] sm:$0xff]
    %v86 = vld [vmem:[#allocation2 + $0x58] sm:$0xff]
    %v87 = vld [vmem:[#allocation2 + $0x60] sm:$0xff]
    %v88 = vld [vmem:[#allocation2 + $0x68] sm:$0xff]
    %v89 = vld [vmem:[#allocation2 + $0x70] sm:$0xff]
    %v90 = vld [vmem:[#allocation2 + $0x78] sm:$0xff]
    %v91 = vld [vmem:[#allocation2 + $0x80] sm:$0xff]
    %v92 = vld [vmem:[#allocation2 + $0x88] sm:$0xff]
    %v93 = vld [vmem:[#allocation2 + $0x90] sm:$0xff]
    %v94 = vld [vmem:[#allocation2 + $0x98] sm:$0xff]
    %v95 = vld [vmem:[#allocation2 + $0xa0] sm:$0xff]
    %v96 = vld [vmem:[#allocation2 + $0xa8] sm:$0xff]
    %v97 = vld [vmem:[#allocation2 + $0xb0] sm:$0xff]
    %v98 = vld [vmem:[#allocation2 + $0xb8] sm:$0xff]
    %v99 = vld [vmem:[#allocation2 + $0xc0] sm:$0xff]
    %v100 = vld [vmem:[#allocation2 + $0xc8] sm:$0xff]
    %v101 = vld [vmem:[#allocation2 + $0xd0] sm:$0xff]
    %v102 = vld [vmem:[#allocation2 + $0xd8] sm:$0xff]
    %v103 = vld [vmem:[#allocation2 + $0xe0] sm:$0xff]
    %v104 = vld [vmem:[#allocation2 + $0xe8] sm:$0xff]
    %v105 = vld [vmem:[#allocation2 + $0xf0] sm:$0xff]
    %v106 = vld [vmem:[#allocation2 + $0xf8] sm:$0xff]
    %v107 = vld [vmem:[#allocation5] sm:$0xf]
    %v108 = vld [vmem:[#allocation5 + $0x4] sm:$0xf]
    %v109 = vld [vmem:[#allocation5 + $0x8] sm:$0xf]
    %v110 = vld [vmem:[#allocation5 + $0xc] sm:$0xf]
    %v111 = vld [vmem:[#allocation5 + $0x10] sm:$0xf]
    %v112 = vld [vmem:[#allocation5 + $0x14] sm:$0xf]
    %v113 = vld [vmem:[#allocation5 + $0x18] sm:$0xf]
    %v114 = vld [vmem:[#allocation5 + $0x1c] sm:$0xf]
    %v115 = vld [vmem:[#allocation5 + $0x20] sm:$0xf]
    %v116 = vld [vmem:[#allocation5 + $0x24] sm:$0xf]
    %v117 = vld [vmem:[#allocation5 + $0x28] sm:$0xf]
    %v118 = vld [vmem:[#allocation5 + $0x2c] sm:$0xf]
    %v119 = vld [vmem:[#allocation5 + $0x30] sm:$0xf]
    %v120 = vld [vmem:[#allocation5 + $0x34] sm:$0xf]
    %v121 = vld [vmem:[#allocation5 + $0x38] sm:$0xf]
    %v122 = vld [vmem:[#allocation5 + $0x3c] sm:$0xf]
    %v123 = vld [vmem:[#allocation5 + $0x40] sm:$0xf]
    %v124 = vld [vmem:[#allocation5 + $0x44] sm:$0xf]
    %v125 = vld [vmem:[#allocation5 + $0x48] sm:$0xf]
    %v126 = vld [vmem:[#allocation5 + $0x4c] sm:$0xf]
    %v127 = vld [vmem:[#allocation5 + $0x50] sm:$0xf]
    %v128 = vld [vmem:[#allocation5 + $0x54] sm:$0xf]
    %v129 = vld [vmem:[#allocation5 + $0x58] sm:$0xf]
    %v130 = vld [vmem:[#allocation5 + $0x5c] sm:$0xf]
    %v131 = vld [vmem:[#allocation5 + $0x60] sm:$0xf]
    %v132 = vld [vmem:[#allocation5 + $0x64] sm:$0xf]
    %v133 = vld [vmem:[#allocation5 + $0x68] sm:$0xf]
    %v134 = vld [vmem:[#allocation5 + $0x6c] sm:$0xf]
    %v135 = vld [vmem:[#allocation5 + $0x70] sm:$0xf]
    %v136 = vld [vmem:[#allocation5 + $0x74] sm:$0xf]
    %v137 = vld [vmem:[#allocation5 + $0x78] sm:$0xf]
    %v138 = vld [vmem:[#allocation5 + $0x7c] sm:$0xf]
    %v139 = vld [vmem:[#allocation8] sm:$0xf]
    %v140 = vld [vmem:[#allocation8 + $0x4] sm:$0xf]
    %v141 = vld [vmem:[#allocation8 + $0x8] sm:$0xf]
    %v142 = vld [vmem:[#allocation8 + $0xc] sm:$0xf]
    %v143 = vld [vmem:[#allocation8 + $0x10] sm:$0xf]
    %v144 = vld [vmem:[#allocation8 + $0x14] sm:$0xf]
    %v145 = vld [vmem:[#allocation8 + $0x18] sm:$0xf]
    %v146 = vld [vmem:[#allocation8 + $0x1c] sm:$0xf]
    %v147 = vld [vmem:[#allocation8 + $0x20] sm:$0xf]
    %v148 = vld [vmem:[#allocation8 + $0x24] sm:$0xf]
    %v149 = vld [vmem:[#allocation8 + $0x28] sm:$0xf]
    %v150 = vld [vmem:[#allocation8 + $0x2c] sm:$0xf]
    %v151 = vld [vmem:[#allocation8 + $0x30] sm:$0xf]
    %v152 = vld [vmem:[#allocation8 + $0x34] sm:$0xf]
    %v153 = vld [vmem:[#allocation8 + $0x38] sm:$0xf]
    %v154 = vld [vmem:[#allocation8 + $0x3c] sm:$0xf]
    %v155 = vld [vmem:[%s4] sm:$0x1]
    %v188 = vunpack.c.l.b16 %v75
    %v189 = vunpack.c.h.b16 %v75
    %v190 = vunpack.c.l.b16 %v76
    %v191 = vunpack.c.h.b16 %v76
    %v192 = vunpack.c.l.b16 %v77
    %v193 = vunpack.c.h.b16 %v77
    %v194 = vunpack.c.l.b16 %v78
    %v195 = vunpack.c.h.b16 %v78
    %v196 = vunpack.c.l.b16 %v79
    %v197 = vunpack.c.h.b16 %v79
    %v198 = vunpack.c.l.b16 %v80
    %v199 = vunpack.c.h.b16 %v80
    %v200 = vunpack.c.l.b16 %v81
    %v201 = vunpack.c.h.b16 %v81
    %v202 = vunpack.c.l.b16 %v82
    %v203 = vunpack.c.h.b16 %v82
    %v204 = vunpack.c.l.b16 %v83
    %v205 = vunpack.c.h.b16 %v83
    %v206 = vunpack.c.l.b16 %v84
    %v207 = vunpack.c.h.b16 %v84
    %v208 = vunpack.c.l.b16 %v85
    %v209 = vunpack.c.h.b16 %v85
    %v210 = vunpack.c.l.b16 %v86
    %v211 = vunpack.c.h.b16 %v86
    %v212 = vunpack.c.l.b16 %v87
    %v213 = vunpack.c.h.b16 %v87
    %v214 = vunpack.c.l.b16 %v88
    %v215 = vunpack.c.h.b16 %v88
    %v216 = vunpack.c.l.b16 %v89
    %v217 = vunpack.c.h.b16 %v89
    %v218 = vunpack.c.l.b16 %v90
    %v219 = vunpack.c.h.b16 %v90
    %v220 = vunpack.c.l.b16 %v91
    %v221 = vunpack.c.h.b16 %v91
    %v222 = vunpack.c.l.b16 %v92
    %v223 = vunpack.c.h.b16 %v92
    %v224 = vunpack.c.l.b16 %v93
    %v225 = vunpack.c.h.b16 %v93
    %v226 = vunpack.c.l.b16 %v94
    %v227 = vunpack.c.h.b16 %v94
    %v228 = vunpack.c.l.b16 %v95
    %v229 = vunpack.c.h.b16 %v95
    %v230 = vunpack.c.l.b16 %v96
    %v231 = vunpack.c.h.b16 %v96
    %v232 = vunpack.c.l.b16 %v97
    %v233 = vunpack.c.h.b16 %v97
    %v234 = vunpack.c.l.b16 %v98
    %v235 = vunpack.c.h.b16 %v98
    %v236 = vunpack.c.l.b16 %v99
    %v237 = vunpack.c.h.b16 %v99
    %v238 = vunpack.c.l.b16 %v100
    %v239 = vunpack.c.h.b16 %v100
    %v240 = vunpack.c.l.b16 %v101
    %v241 = vunpack.c.h.b16 %v101
    %v242 = vunpack.c.l.b16 %v102
    %v243 = vunpack.c.h.b16 %v102
    %v244 = vunpack.c.l.b16 %v103
    %v245 = vunpack.c.h.b16 %v103
    %v246 = vunpack.c.l.b16 %v104
    %v247 = vunpack.c.h.b16 %v104
    %v248 = vunpack.c.l.b16 %v105
    %v249 = vunpack.c.h.b16 %v105
    %v250 = vunpack.c.l.b16 %v106
    %v251 = vunpack.c.h.b16 %v106
    %v252 = vpack.c.b16 %v190, %v188
    %v253 = vpack.c.b16 %v191, %v189
    %v254 = vpack.c.b16 %v194, %v192
    %v255 = vpack.c.b16 %v195, %v193
    %v256 = vpack.c.b16 %v198, %v196
    %v257 = vpack.c.b16 %v199, %v197
    %v258 = vpack.c.b16 %v202, %v200
    %v259 = vpack.c.b16 %v203, %v201
    %v260 = vpack.c.b16 %v206, %v204
    %v261 = vpack.c.b16 %v207, %v205
    %v262 = vpack.c.b16 %v210, %v208
    %v263 = vpack.c.b16 %v211, %v209
    %v264 = vpack.c.b16 %v214, %v212
    %v265 = vpack.c.b16 %v215, %v213
    %v266 = vpack.c.b16 %v218, %v216
    %v267 = vpack.c.b16 %v219, %v217
    %v268 = vpack.c.b16 %v222, %v220
    %v269 = vpack.c.b16 %v223, %v221
    %v270 = vpack.c.b16 %v226, %v224
    %v271 = vpack.c.b16 %v227, %v225
    %v272 = vpack.c.b16 %v230, %v228
    %v273 = vpack.c.b16 %v231, %v229
    %v274 = vpack.c.b16 %v234, %v232
    %v275 = vpack.c.b16 %v235, %v233
    %v276 = vpack.c.b16 %v238, %v236
    %v277 = vpack.c.b16 %v239, %v237
    %v278 = vpack.c.b16 %v242, %v240
    %v279 = vpack.c.b16 %v243, %v241
    %v280 = vpack.c.b16 %v246, %v244
    %v281 = vpack.c.b16 %v247, %v245
    %v282 = vpack.c.b16 %v250, %v248
    %v283 = vpack.c.b16 %v251, %v249
    %v348 = vunpack.c.l.b16 %v107
    %v349 = vunpack.c.l.b16 %v108
    %v350 = vunpack.c.l.b16 %v109
    %v351 = vunpack.c.l.b16 %v110
    %v352 = vunpack.c.l.b16 %v111
    %v353 = vunpack.c.l.b16 %v112
    %v354 = vunpack.c.l.b16 %v113
    %v355 = vunpack.c.l.b16 %v114
    %v356 = vunpack.c.l.b16 %v115
    %v357 = vunpack.c.l.b16 %v116
    %v358 = vunpack.c.l.b16 %v117
    %v359 = vunpack.c.l.b16 %v118
    %v360 = vunpack.c.l.b16 %v119
    %v361 = vunpack.c.l.b16 %v120
    %v362 = vunpack.c.l.b16 %v121
    %v363 = vunpack.c.l.b16 %v122
    %v364 = vunpack.c.l.b16 %v123
    %v365 = vunpack.c.l.b16 %v124
    %v366 = vunpack.c.l.b16 %v125
    %v367 = vunpack.c.l.b16 %v126
    %v368 = vunpack.c.l.b16 %v127
    %v369 = vunpack.c.l.b16 %v128
    %v370 = vunpack.c.l.b16 %v129
    %v371 = vunpack.c.l.b16 %v130
    %v372 = vunpack.c.l.b16 %v131
    %v373 = vunpack.c.l.b16 %v132
    %v374 = vunpack.c.l.b16 %v133
    %v375 = vunpack.c.l.b16 %v134
    %v376 = vunpack.c.l.b16 %v135
    %v377 = vunpack.c.l.b16 %v136
    %v378 = vunpack.c.l.b16 %v137
    %v379 = vunpack.c.l.b16 %v138
    %v380 = vpack.c.b16 %v349, %v348
    %v381 = vpack.c.b16 %v351, %v350
    %v382 = vpack.c.b16 %v353, %v352
    %v383 = vpack.c.b16 %v355, %v354
    %v384 = vpack.c.b16 %v357, %v356
    %v385 = vpack.c.b16 %v359, %v358
    %v386 = vpack.c.b16 %v361, %v360
    %v387 = vpack.c.b16 %v363, %v362
    %v388 = vpack.c.b16 %v365, %v364
    %v389 = vpack.c.b16 %v367, %v366
    %v390 = vpack.c.b16 %v369, %v368
    %v391 = vpack.c.b16 %v371, %v370
    %v392 = vpack.c.b16 %v373, %v372
    %v393 = vpack.c.b16 %v375, %v374
    %v394 = vpack.c.b16 %v377, %v376
    %v395 = vpack.c.b16 %v379, %v378
    %412 = vmatprep.subr.bf16.mxu0 0
    %413 = vmatpush1.bf16.msra.mxu0 %v380
    %414 = vmatprep.subr.bf16.mxu0 0
    %415 = vmatpush1.bf16.msra.mxu0 %v381
    %416 = vmatprep.subr.bf16.mxu0 0
    %417 = vmatpush1.bf16.msra.mxu0 %v382
    %418 = vmatprep.subr.bf16.mxu0 0
    %419 = vmatpush1.bf16.msra.mxu0 %v383
    %420 = vmatprep.subr.bf16.mxu0 0
    %421 = vmatpush1.bf16.msra.mxu0 %v384
    %422 = vmatprep.subr.bf16.mxu0 0
    %423 = vmatpush1.bf16.msra.mxu0 %v385
    %424 = vmatprep.subr.bf16.mxu0 0
    %425 = vmatpush1.bf16.msra.mxu0 %v386
    %426 = vmatprep.subr.bf16.mxu0 0
    %427 = vmatpush1.bf16.msra.mxu0 %v387
    %428 = vmatprep.subr.bf16.mxu0 0
    %429 = vmatpush1.bf16.msra.mxu0 %v388
    %430 = vmatprep.subr.bf16.mxu0 0
    %431 = vmatpush1.bf16.msra.mxu0 %v389
    %432 = vmatprep.subr.bf16.mxu0 0
    %433 = vmatpush1.bf16.msra.mxu0 %v390
    %434 = vmatprep.subr.bf16.mxu0 0
    %435 = vmatpush1.bf16.msra.mxu0 %v391
    %436 = vmatprep.subr.bf16.mxu0 0
    %437 = vmatpush1.bf16.msra.mxu0 %v392
    %438 = vmatprep.subr.bf16.mxu0 0
    %439 = vmatpush1.bf16.msra.mxu0 %v393
    %440 = vmatprep.subr.bf16.mxu0 0
    %441 = vmatpush1.bf16.msra.mxu0 %v394
    %442 = vmatprep.subr.bf16.mxu0 0
    %443 = vmatpush1.bf16.msra.mxu0 %v395
    %444 = vmatprep.mubr.bf16.mxu0 %v253
    %445 = vmatmul.mubr.bf16.gmra.mrb[0].mxu0 %v252
    %v446 = vpop.f32.mrb[0].mxu0
    %v447 = vadd.f32 0.0, %v446
    %v448 = vpop.f32.mrb[0].mxu0
    %v449 = vpop.f32.mrb[0].mxu0
    %v450 = vadd.f32 0.0, %v449
    %v451 = vpop.f32.mrb[0].mxu0
    %452 = vmatprep.mubr.bf16.mxu0 %v255
    %453 = vmatmul.mubr.bf16.gmra.mrb[0].mxu0 %v254
    %v454 = vpop.f32.mrb[0].mxu0
    %v455 = vadd.f32 0.0, %v454
    %v456 = vpop.f32.mrb[0].mxu0
    %v457 = vpop.f32.mrb[0].mxu0
    %v458 = vadd.f32 0.0, %v457
    %v459 = vpop.f32.mrb[0].mxu0
    %460 = vmatprep.mubr.bf16.mxu0 %v257
    %461 = vmatmul.mubr.bf16.gmra.mrb[0].mxu0 %v256
    %v462 = vpop.f32.mrb[0].mxu0
    %v463 = vadd.f32 0.0, %v462
    %v464 = vpop.f32.mrb[0].mxu0
    %v465 = vpop.f32.mrb[0].mxu0
    %v466 = vadd.f32 0.0, %v465
    %v467 = vpop.f32.mrb[0].mxu0
    %468 = vmatprep.mubr.bf16.mxu0 %v259
    %469 = vmatmul.mubr.bf16.gmra.mrb[0].mxu0 %v258
    %v470 = vpop.f32.mrb[0].mxu0
    %v471 = vadd.f32 0.0, %v470
    %v472 = vpop.f32.mrb[0].mxu0
    %v473 = vpop.f32.mrb[0].mxu0
    %v474 = vadd.f32 0.0, %v473
    %v475 = vpop.f32.mrb[0].mxu0
    %476 = vmatprep.mubr.bf16.mxu0 %v261
    %477 = vmatmul.mubr.bf16.gmra.mrb[0].mxu0 %v260
    %v478 = vpop.f32.mrb[0].mxu0
    %v479 = vadd.f32 0.0, %v478
    %v480 = vpop.f32.mrb[0].mxu0
    %v481 = vpop.f32.mrb[0].mxu0
    %v482 = vadd.f32 0.0, %v481
    %v483 = vpop.f32.mrb[0].mxu0
    %484 = vmatprep.mubr.bf16.mxu0 %v263
    %485 = vmatmul.mubr.bf16.gmra.mrb[0].mxu0 %v262
    %v486 = vpop.f32.mrb[0].mxu0
    %v487 = vadd.f32 0.0, %v486
    %v488 = vpop.f32.mrb[0].mxu0
    %v489 = vpop.f32.mrb[0].mxu0
    %v490 = vadd.f32 0.0, %v489
    %v491 = vpop.f32.mrb[0].mxu0
    %492 = vmatprep.mubr.bf16.mxu0 %v265
    %493 = vmatmul.mubr.bf16.gmra.mrb[0].mxu0 %v264
    %v494 = vpop.f32.mrb[0].mxu0
    %v495 = vadd.f32 0.0, %v494
    %v496 = vpop.f32.mrb[0].mxu0
    %v497 = vpop.f32.mrb[0].mxu0
    %v498 = vadd.f32 0.0, %v497
    %v499 = vpop.f32.mrb[0].mxu0
    %500 = vmatprep.mubr.bf16.mxu0 %v267
    %501 = vmatmul.mubr.bf16.gmra.mrb[0].mxu0 %v266
    %v502 = vpop.f32.mrb[0].mxu0
    %v503 = vadd.f32 0.0, %v502
    %v504 = vpop.f32.mrb[0].mxu0
    %v505 = vpop.f32.mrb[0].mxu0
    %v506 = vadd.f32 0.0, %v505
    %v507 = vpop.f32.mrb[0].mxu0
    %508 = vmatprep.mubr.bf16.mxu0 %v269
    %509 = vmatmul.mubr.bf16.gmra.mrb[0].mxu0 %v268
    %v510 = vpop.f32.mrb[0].mxu0
    %v511 = vadd.f32 0.0, %v510
    %v512 = vpop.f32.mrb[0].mxu0
    %v513 = vpop.f32.mrb[0].mxu0
    %v514 = vadd.f32 0.0, %v513
    %v515 = vpop.f32.mrb[0].mxu0
    %516 = vmatprep.mubr.bf16.mxu0 %v271
    %517 = vmatmul.mubr.bf16.gmra.mrb[0].mxu0 %v270
    %v518 = vpop.f32.mrb[0].mxu0
    %v519 = vadd.f32 0.0, %v518
    %v520 = vpop.f32.mrb[0].mxu0
    %v521 = vpop.f32.mrb[0].mxu0
    %v522 = vadd.f32 0.0, %v521
    %v523 = vpop.f32.mrb[0].mxu0
    %524 = vmatprep.mubr.bf16.mxu0 %v273
    %525 = vmatmul.mubr.bf16.gmra.mrb[0].mxu0 %v272
    %v526 = vpop.f32.mrb[0].mxu0
    %v527 = vadd.f32 0.0, %v526
    %v528 = vpop.f32.mrb[0].mxu0
    %v529 = vpop.f32.mrb[0].mxu0
    %v530 = vadd.f32 0.0, %v529
    %v531 = vpop.f32.mrb[0].mxu0
    %532 = vmatprep.mubr.bf16.mxu0 %v275
    %533 = vmatmul.mubr.bf16.gmra.mrb[0].mxu0 %v274
    %v534 = vpop.f32.mrb[0].mxu0
    %v535 = vadd.f32 0.0, %v534
    %v536 = vpop.f32.mrb[0].mxu0
    %v537 = vpop.f32.mrb[0].mxu0
    %v538 = vadd.f32 0.0, %v537
    %v539 = vpop.f32.mrb[0].mxu0
    %540 = vmatprep.mubr.bf16.mxu0 %v277
    %541 = vmatmul.mubr.bf16.gmra.mrb[0].mxu0 %v276
    %v542 = vpop.f32.mrb[0].mxu0
    %v543 = vadd.f32 0.0, %v542
    %v544 = vpop.f32.mrb[0].mxu0
    %v545 = vpop.f32.mrb[0].mxu0
    %v546 = vadd.f32 0.0, %v545
    %v547 = vpop.f32.mrb[0].mxu0
    %548 = vmatprep.mubr.bf16.mxu0 %v279
    %549 = vmatmul.mubr.bf16.gmra.mrb[0].mxu0 %v278
    %v550 = vpop.f32.mrb[0].mxu0
    %v551 = vadd.f32 0.0, %v550
    %v552 = vpop.f32.mrb[0].mxu0
    %v553 = vpop.f32.mrb[0].mxu0
    %v554 = vadd.f32 0.0, %v553
    %v555 = vpop.f32.mrb[0].mxu0
    %556 = vmatprep.mubr.bf16.mxu0 %v281
    %557 = vmatmul.mubr.bf16.gmra.mrb[0].mxu0 %v280
    %v558 = vpop.f32.mrb[0].mxu0
    %v559 = vadd.f32 0.0, %v558
    %v560 = vpop.f32.mrb[0].mxu0
    %v561 = vpop.f32.mrb[0].mxu0
    %v562 = vadd.f32 0.0, %v561
    %v563 = vpop.f32.mrb[0].mxu0
    %564 = vmatprep.mubr.bf16.mxu0 %v283
    %565 = vmatmul.mubr.bf16.gmra.mrb[0].mxu0 %v282
    %v566 = vpop.f32.mrb[0].mxu0
    %v567 = vadd.f32 0.0, %v566
    %v568 = vpop.f32.mrb[0].mxu0
    %v569 = vpop.f32.mrb[0].mxu0
    %v570 = vadd.f32 0.0, %v569
    %v571 = vpop.f32.mrb[0].mxu0
    %572 = vdwg.mxu0
    %v573 = vpack.c.bf16 %v450, %v447
    %v574 = vpack.c.bf16 %v458, %v455
    %v575 = vpack.c.bf16 %v466, %v463
    %v576 = vpack.c.bf16 %v474, %v471
    %v577 = vpack.c.bf16 %v482, %v479
    %v578 = vpack.c.bf16 %v490, %v487
    %v579 = vpack.c.bf16 %v498, %v495
    %v580 = vpack.c.bf16 %v506, %v503
    %v581 = vpack.c.bf16 %v514, %v511
    %v582 = vpack.c.bf16 %v522, %v519
    %v583 = vpack.c.bf16 %v530, %v527
    %v584 = vpack.c.bf16 %v538, %v535
    %v585 = vpack.c.bf16 %v546, %v543
    %v586 = vpack.c.bf16 %v554, %v551
    %v587 = vpack.c.bf16 %v562, %v559
    %v588 = vpack.c.bf16 %v570, %v567
    %v590 = vlaneseq
    %v591 = vshrl.u32 %v590, 7
    %v592 = vsub.s32 0, %v591
    %v593 = vrot.slane %v155, %v592
    %v611 = vunpack.c.l.b16 %v139
    %v612 = vunpack.c.l.b16 %v140
    %v613 = vunpack.c.l.b16 %v141
    %v614 = vunpack.c.l.b16 %v142
    %v615 = vunpack.c.l.b16 %v143
    %v616 = vunpack.c.l.b16 %v144
    %v617 = vunpack.c.l.b16 %v145
    %v618 = vunpack.c.l.b16 %v146
    %v619 = vunpack.c.l.b16 %v147
    %v620 = vunpack.c.l.b16 %v148
    %v621 = vunpack.c.l.b16 %v149
    %v622 = vunpack.c.l.b16 %v150
    %v623 = vunpack.c.l.b16 %v151
    %v624 = vunpack.c.l.b16 %v152
    %v625 = vunpack.c.l.b16 %v153
    %v626 = vunpack.c.l.b16 %v154
    %v627 = vpack.c.b16 %v612, %v611
    %v628 = vpack.c.b16 %v614, %v613
    %v629 = vpack.c.b16 %v616, %v615
    %v630 = vpack.c.b16 %v618, %v617
    %v631 = vpack.c.b16 %v620, %v619
    %v632 = vpack.c.b16 %v622, %v621
    %v633 = vpack.c.b16 %v624, %v623
    %v634 = vpack.c.b16 %v626, %v625
    %643 = vmatprep.subr.bf16.mxu0 0
    %644 = vmatpush1.bf16.msra.mxu0 %v627
    %645 = vmatprep.subr.bf16.mxu0 0
    %646 = vmatpush1.bf16.msra.mxu0 %v628
    %647 = vmatprep.subr.bf16.mxu0 0
    %648 = vmatpush1.bf16.msra.mxu0 %v629
    %649 = vmatprep.subr.bf16.mxu0 0
    %650 = vmatpush1.bf16.msra.mxu0 %v630
    %651 = vmatprep.subr.bf16.mxu0 0
    %652 = vmatpush1.bf16.msra.mxu0 %v631
    %653 = vmatprep.subr.bf16.mxu0 0
    %654 = vmatpush1.bf16.msra.mxu0 %v632
    %655 = vmatprep.subr.bf16.mxu0 0
    %656 = vmatpush1.bf16.msra.mxu0 %v633
    %657 = vmatprep.subr.bf16.mxu0 0
    %658 = vmatpush1.bf16.msra.mxu0 %v634
    %659 = vmatprep.subr.bf16.mxu0 0
    %660 = vmatpush1.bf16.msra.mxu0 0
    %661 = vmatprep.subr.bf16.mxu0 0
    %662 = vmatpush1.bf16.msra.mxu0 0
    %663 = vmatprep.subr.bf16.mxu0 0
    %664 = vmatpush1.bf16.msra.mxu0 0
    %665 = vmatprep.subr.bf16.mxu0 0
    %666 = vmatpush1.bf16.msra.mxu0 0
    %667 = vmatprep.subr.bf16.mxu0 0
    %668 = vmatpush1.bf16.msra.mxu0 0
    %669 = vmatprep.subr.bf16.mxu0 0
    %670 = vmatpush1.bf16.msra.mxu0 0
    %671 = vmatprep.subr.bf16.mxu0 0
    %672 = vmatpush1.bf16.msra.mxu0 0
    %673 = vmatprep.subr.bf16.mxu0 0
    %674 = vmatpush1.bf16.msra.mxu0 0
    %675 = vmatprep.mubr.bf16.mxu0 0
    %676 = vmatmul.mubr.bf16.gmra.mrb[0].mxu0 %v573
    %v677 = vpop.f32.mrb[0].mxu0
    %v678 = vadd.f32 %v593, %v677
    %v679 = vpop.f32.mrb[0].mxu0
    %v680 = vpop.f32.mrb[0].mxu0
    %v681 = vadd.f32 %v593, %v680
    %v682 = vpop.f32.mrb[0].mxu0
    %683 = vmatprep.mubr.bf16.mxu0 0
    %684 = vmatmul.mubr.bf16.gmra.mrb[0].mxu0 %v574
    %v685 = vpop.f32.mrb[0].mxu0
    %v686 = vadd.f32 %v593, %v685
    %v687 = vpop.f32.mrb[0].mxu0
    %v688 = vpop.f32.mrb[0].mxu0
    %v689 = vadd.f32 %v593, %v688
    %v690 = vpop.f32.mrb[0].mxu0
    %691 = vmatprep.mubr.bf16.mxu0 0
    %692 = vmatmul.mubr.bf16.gmra.mrb[0].mxu0 %v575
    %v693 = vpop.f32.mrb[0].mxu0
    %v694 = vadd.f32 %v593, %v693
    %v695 = vpop.f32.mrb[0].mxu0
    %v696 = vpop.f32.mrb[0].mxu0
    %v697 = vadd.f32 %v593, %v696
    %v698 = vpop.f32.mrb[0].mxu0
    %699 = vmatprep.mubr.bf16.mxu0 0
    %700 = vmatmul.mubr.bf16.gmra.mrb[0].mxu0 %v576
    %v701 = vpop.f32.mrb[0].mxu0
    %v702 = vadd.f32 %v593, %v701
    %v703 = vpop.f32.mrb[0].mxu0
    %v704 = vpop.f32.mrb[0].mxu0
    %v705 = vadd.f32 %v593, %v704
    %v706 = vpop.f32.mrb[0].mxu0
    %707 = vmatprep.mubr.bf16.mxu0 0
    %708 = vmatmul.mubr.bf16.gmra.mrb[0].mxu0 %v577
    %v709 = vpop.f32.mrb[0].mxu0
    %v710 = vadd.f32 %v593, %v709
    %v711 = vpop.f32.mrb[0].mxu0
    %v712 = vpop.f32.mrb[0].mxu0
    %v713 = vadd.f32 %v593, %v712
    %v714 = vpop.f32.mrb[0].mxu0
    %715 = vmatprep.mubr.bf16.mxu0 0
    %716 = vmatmul.mubr.bf16.gmra.mrb[0].mxu0 %v578
    %v717 = vpop.f32.mrb[0].mxu0
    %v718 = vadd.f32 %v593, %v717
    %v719 = vpop.f32.mrb[0].mxu0
    %v720 = vpop.f32.mrb[0].mxu0
    %v721 = vadd.f32 %v593, %v720
    %v722 = vpop.f32.mrb[0].mxu0
    %723 = vmatprep.mubr.bf16.mxu0 0
    %724 = vmatmul.mubr.bf16.gmra.mrb[0].mxu0 %v579
    %v725 = vpop.f32.mrb[0].mxu0
    %v726 = vadd.f32 %v593, %v725
    %v727 = vpop.f32.mrb[0].mxu0
    %v728 = vpop.f32.mrb[0].mxu0
    %v729 = vadd.f32 %v593, %v728
    %v730 = vpop.f32.mrb[0].mxu0
    %731 = vmatprep.mubr.bf16.mxu0 0
    %732 = vmatmul.mubr.bf16.gmra.mrb[0].mxu0 %v580
    %v733 = vpop.f32.mrb[0].mxu0
    %v734 = vadd.f32 %v593, %v733
    %v735 = vpop.f32.mrb[0].mxu0
    %v736 = vpop.f32.mrb[0].mxu0
    %v737 = vadd.f32 %v593, %v736
    %v738 = vpop.f32.mrb[0].mxu0
    %739 = vmatprep.mubr.bf16.mxu0 0
    %740 = vmatmul.mubr.bf16.gmra.mrb[0].mxu0 %v581
    %v741 = vpop.f32.mrb[0].mxu0
    %v742 = vadd.f32 %v593, %v741
    %v743 = vpop.f32.mrb[0].mxu0
    %v744 = vpop.f32.mrb[0].mxu0
    %v745 = vadd.f32 %v593, %v744
    %v746 = vpop.f32.mrb[0].mxu0
    %747 = vmatprep.mubr.bf16.mxu0 0
    %748 = vmatmul.mubr.bf16.gmra.mrb[0].mxu0 %v582
    %v749 = vpop.f32.mrb[0].mxu0
    %v750 = vadd.f32 %v593, %v749
    %v751 = vpop.f32.mrb[0].mxu0
    %v752 = vpop.f32.mrb[0].mxu0
    %v753 = vadd.f32 %v593, %v752
    %v754 = vpop.f32.mrb[0].mxu0
    %755 = vmatprep.mubr.bf16.mxu0 0
    %756 = vmatmul.mubr.bf16.gmra.mrb[0].mxu0 %v583
    %v757 = vpop.f32.mrb[0].mxu0
    %v758 = vadd.f32 %v593, %v757
    %v759 = vpop.f32.mrb[0].mxu0
    %v760 = vpop.f32.mrb[0].mxu0
    %v761 = vadd.f32 %v593, %v760
    %v762 = vpop.f32.mrb[0].mxu0
    %763 = vmatprep.mubr.bf16.mxu0 0
    %764 = vmatmul.mubr.bf16.gmra.mrb[0].mxu0 %v584
    %v765 = vpop.f32.mrb[0].mxu0
    %v766 = vadd.f32 %v593, %v765
    %v767 = vpop.f32.mrb[0].mxu0
    %v768 = vpop.f32.mrb[0].mxu0
    %v769 = vadd.f32 %v593, %v768
    %v770 = vpop.f32.mrb[0].mxu0
    %771 = vmatprep.mubr.bf16.mxu0 0
    %772 = vmatmul.mubr.bf16.gmra.mrb[0].mxu0 %v585
    %v773 = vpop.f32.mrb[0].mxu0
    %v774 = vadd.f32 %v593, %v773
    %v775 = vpop.f32.mrb[0].mxu0
    %v776 = vpop.f32.mrb[0].mxu0
    %v777 = vadd.f32 %v593, %v776
    %v778 = vpop.f32.mrb[0].mxu0
    %779 = vmatprep.mubr.bf16.mxu0 0
    %780 = vmatmul.mubr.bf16.gmra.mrb[0].mxu0 %v586
    %v781 = vpop.f32.mrb[0].mxu0
    %v782 = vadd.f32 %v593, %v781
    %v783 = vpop.f32.mrb[0].mxu0
    %v784 = vpop.f32.mrb[0].mxu0
    %v785 = vadd.f32 %v593, %v784
    %v786 = vpop.f32.mrb[0].mxu0
    %787 = vmatprep.mubr.bf16.mxu0 0
    %788 = vmatmul.mubr.bf16.gmra.mrb[0].mxu0 %v587
    %v789 = vpop.f32.mrb[0].mxu0
    %v790 = vadd.f32 %v593, %v789
    %v791 = vpop.f32.mrb[0].mxu0
    %v792 = vpop.f32.mrb[0].mxu0
    %v793 = vadd.f32 %v593, %v792
    %v794 = vpop.f32.mrb[0].mxu0
    %795 = vmatprep.mubr.bf16.mxu0 0
    %796 = vmatmul.mubr.bf16.gmra.mrb[0].mxu0 %v588
    %v797 = vpop.f32.mrb[0].mxu0
    %v798 = vadd.f32 %v593, %v797
    %v799 = vpop.f32.mrb[0].mxu0
    %v800 = vpop.f32.mrb[0].mxu0
    %v801 = vadd.f32 %v593, %v800
    %v802 = vpop.f32.mrb[0].mxu0
    %803 = vdwg.mxu0
    %v804 = vmax.f32 %v678, 0.0
    %v805 = vmax.f32 %v681, 0.0
    %v806 = vmax.f32 %v686, 0.0
    %v807 = vmax.f32 %v689, 0.0
    %v808 = vmax.f32 %v694, 0.0
    %v809 = vmax.f32 %v697, 0.0
    %v810 = vmax.f32 %v702, 0.0
    %v811 = vmax.f32 %v705, 0.0
    %v812 = vmax.f32 %v710, 0.0
    %v813 = vmax.f32 %v713, 0.0
    %v814 = vmax.f32 %v718, 0.0
    %v815 = vmax.f32 %v721, 0.0
    %v816 = vmax.f32 %v726, 0.0
    %v817 = vmax.f32 %v729, 0.0
    %v818 = vmax.f32 %v734, 0.0
    %v819 = vmax.f32 %v737, 0.0
    %v820 = vmax.f32 %v742, 0.0
    %v821 = vmax.f32 %v745, 0.0
    %v822 = vmax.f32 %v750, 0.0
    %v823 = vmax.f32 %v753, 0.0
    %v824 = vmax.f32 %v758, 0.0
    %v825 = vmax.f32 %v761, 0.0
    %v826 = vmax.f32 %v766, 0.0
    %v827 = vmax.f32 %v769, 0.0
    %v828 = vmax.f32 %v774, 0.0
    %v829 = vmax.f32 %v777, 0.0
    %v830 = vmax.f32 %v782, 0.0
    %v831 = vmax.f32 %v785, 0.0
    %v832 = vmax.f32 %v790, 0.0
    %v833 = vmax.f32 %v793, 0.0
    %v834 = vmax.f32 %v798, 0.0
    %v835 = vmax.f32 %v801, 0.0
    %v836 = vpack.c.bf16 %v805, %v804
    %v837 = vpack.c.bf16 %v807, %v806
    %v838 = vpack.c.bf16 %v809, %v808
    %v839 = vpack.c.bf16 %v811, %v810
    %v840 = vpack.c.bf16 %v813, %v812
    %v841 = vpack.c.bf16 %v815, %v814
    %v842 = vpack.c.bf16 %v817, %v816
    %v843 = vpack.c.bf16 %v819, %v818
    %v844 = vpack.c.bf16 %v821, %v820
    %v845 = vpack.c.bf16 %v823, %v822
    %v846 = vpack.c.bf16 %v825, %v824
    %v847 = vpack.c.bf16 %v827, %v826
    %v848 = vpack.c.bf16 %v829, %v828
    %v849 = vpack.c.bf16 %v831, %v830
    %v850 = vpack.c.bf16 %v833, %v832
    %v851 = vpack.c.bf16 %v835, %v834
    %s852 = scalar_lea.vmem [#allocation8], 64
    %v853 = vld [vmem:[%s852] sm:$0xf]
    %v854 = vld [vmem:[%s852 + $0x4] sm:$0xf]
    %v855 = vld [vmem:[%s852 + $0x8] sm:$0xf]
    %v856 = vld [vmem:[%s852 + $0xc] sm:$0xf]
    %v857 = vld [vmem:[%s852 + $0x10] sm:$0xf]
    %v858 = vld [vmem:[%s852 + $0x14] sm:$0xf]
    %v859 = vld [vmem:[%s852 + $0x18] sm:$0xf]
    %v860 = vld [vmem:[%s852 + $0x1c] sm:$0xf]
    %v861 = vld [vmem:[%s852 + $0x20] sm:$0xf]
    %v862 = vld [vmem:[%s852 + $0x24] sm:$0xf]
    %v863 = vld [vmem:[%s852 + $0x28] sm:$0xf]
    %v864 = vld [vmem:[%s852 + $0x2c] sm:$0xf]
    %v865 = vld [vmem:[%s852 + $0x30] sm:$0xf]
    %v866 = vld [vmem:[%s852 + $0x34] sm:$0xf]
    %v867 = vld [vmem:[%s852 + $0x38] sm:$0xf]
    %v868 = vld [vmem:[%s852 + $0x3c] sm:$0xf]
    %s869 = scalar_lea.vmem %s4, 1
    %v870 = vld [vmem:[%s869] sm:$0x1]
    %871 = vmatprep.subr.bf16.mxu0 0
    %872 = vmatpush1.bf16.msra.mxu0 %v836
    %873 = vmatprep.subr.bf16.mxu0 0
    %874 = vmatpush1.bf16.msra.mxu0 %v837
    %875 = vmatprep.subr.bf16.mxu0 0
    %876 = vmatpush1.bf16.msra.mxu0 %v838
    %877 = vmatprep.subr.bf16.mxu0 0
    %878 = vmatpush1.bf16.msra.mxu0 %v839
    %879 = vmatprep.subr.bf16.mxu0 0
    %880 = vmatpush1.bf16.msra.mxu0 %v840
    %881 = vmatprep.subr.bf16.mxu0 0
    %882 = vmatpush1.bf16.msra.mxu0 %v841
    %883 = vmatprep.subr.bf16.mxu0 0
    %884 = vmatpush1.bf16.msra.mxu0 %v842
    %885 = vmatprep.subr.bf16.mxu0 0
    %886 = vmatpush1.bf16.msra.mxu0 %v843
    %887 = vmatprep.subr.bf16.mxu0 0
    %888 = vmatpush1.bf16.msra.mxu0 %v844
    %889 = vmatprep.subr.bf16.mxu0 0
    %890 = vmatpush1.bf16.msra.mxu0 %v845
    %891 = vmatprep.subr.bf16.mxu0 0
    %892 = vmatpush1.bf16.msra.mxu0 %v846
    %893 = vmatprep.subr.bf16.mxu0 0
    %894 = vmatpush1.bf16.msra.mxu0 %v847
    %895 = vmatprep.subr.bf16.mxu0 0
    %896 = vmatpush1.bf16.msra.mxu0 %v848
    %897 = vmatprep.subr.bf16.mxu0 0
    %898 = vmatpush1.bf16.msra.mxu0 %v849
    %899 = vmatprep.subr.bf16.mxu0 0
    %900 = vmatpush1.bf16.msra.mxu0 %v850
    %901 = vmatprep.subr.bf16.mxu0 0
    %902 = vmatpush1.bf16.msra.mxu0 %v851
    %903 = vmatprep.mubr.bf16.mxu0 %v253
    %904 = vmatmul.mubr.bf16.gmra.mrb[0].mxu0 %v252
    %v905 = vpop.f32.mrb[0].mxu0
    %v906 = vadd.f32 0.0, %v905
    %v907 = vpop.f32.mrb[0].mxu0
    %v908 = vpop.f32.mrb[0].mxu0
    %v909 = vadd.f32 0.0, %v908
    %v910 = vpop.f32.mrb[0].mxu0
    %911 = vmatprep.mubr.bf16.mxu0 %v255
    %912 = vmatmul.mubr.bf16.gmra.mrb[0].mxu0 %v254
    %v913 = vpop.f32.mrb[0].mxu0
    %v914 = vadd.f32 0.0, %v913
    %v915 = vpop.f32.mrb[0].mxu0
    %v916 = vpop.f32.mrb[0].mxu0
    %v917 = vadd.f32 0.0, %v916
    %v918 = vpop.f32.mrb[0].mxu0
    %919 = vmatprep.mubr.bf16.mxu0 %v257
    %920 = vmatmul.mubr.bf16.gmra.mrb[0].mxu0 %v256
    %v921 = vpop.f32.mrb[0].mxu0
    %v922 = vadd.f32 0.0, %v921
    %v923 = vpop.f32.mrb[0].mxu0
    %v924 = vpop.f32.mrb[0].mxu0
    %v925 = vadd.f32 0.0, %v924
    %v926 = vpop.f32.mrb[0].mxu0
    %927 = vmatprep.mubr.bf16.mxu0 %v259
    %928 = vmatmul.mubr.bf16.gmra.mrb[0].mxu0 %v258
    %v929 = vpop.f32.mrb[0].mxu0
    %v930 = vadd.f32 0.0, %v929
    %v931 = vpop.f32.mrb[0].mxu0
    %v932 = vpop.f32.mrb[0].mxu0
    %v933 = vadd.f32 0.0, %v932
    %v934 = vpop.f32.mrb[0].mxu0
    %935 = vmatprep.mubr.bf16.mxu0 %v261
    %936 = vmatmul.mubr.bf16.gmra.mrb[0].mxu0 %v260
    %v937 = vpop.f32.mrb[0].mxu0
    %v938 = vadd.f32 0.0, %v937
    %v939 = vpop.f32.mrb[0].mxu0
    %v940 = vpop.f32.mrb[0].mxu0
    %v941 = vadd.f32 0.0, %v940
    %v942 = vpop.f32.mrb[0].mxu0
    %943 = vmatprep.mubr.bf16.mxu0 %v263
    %944 = vmatmul.mubr.bf16.gmra.mrb[0].mxu0 %v262
    %v945 = vpop.f32.mrb[0].mxu0
    %v946 = vadd.f32 0.0, %v945
    %v947 = vpop.f32.mrb[0].mxu0
    %v948 = vpop.f32.mrb[0].mxu0
    %v949 = vadd.f32 0.0, %v948
    %v950 = vpop.f32.mrb[0].mxu0
    %951 = vmatprep.mubr.bf16.mxu0 %v265
    %952 = vmatmul.mubr.bf16.gmra.mrb[0].mxu0 %v264
    %v953 = vpop.f32.mrb[0].mxu0
    %v954 = vadd.f32 0.0, %v953
    %v955 = vpop.f32.mrb[0].mxu0
    %v956 = vpop.f32.mrb[0].mxu0
    %v957 = vadd.f32 0.0, %v956
    %v958 = vpop.f32.mrb[0].mxu0
    %959 = vmatprep.mubr.bf16.mxu0 %v267
    %960 = vmatmul.mubr.bf16.gmra.mrb[0].mxu0 %v266
    %v961 = vpop.f32.mrb[0].mxu0
    %v962 = vadd.f32 0.0, %v961
    %v963 = vpop.f32.mrb[0].mxu0
    %v964 = vpop.f32.mrb[0].mxu0
    %v965 = vadd.f32 0.0, %v964
    %v966 = vpop.f32.mrb[0].mxu0
    %967 = vmatprep.mubr.bf16.mxu0 %v269
    %968 = vmatmul.mubr.bf16.gmra.mrb[0].mxu0 %v268
    %v969 = vpop.f32.mrb[0].mxu0
    %v970 = vadd.f32 0.0, %v969
    %v971 = vpop.f32.mrb[0].mxu0
    %v972 = vpop.f32.mrb[0].mxu0
    %v973 = vadd.f32 0.0, %v972
    %v974 = vpop.f32.mrb[0].mxu0
    %975 = vmatprep.mubr.bf16.mxu0 %v271
    %976 = vmatmul.mubr.bf16.gmra.mrb[0].mxu0 %v270
    %v977 = vpop.f32.mrb[0].mxu0
    %v978 = vadd.f32 0.0, %v977
    %v979 = vpop.f32.mrb[0].mxu0
    %v980 = vpop.f32.mrb[0].mxu0
    %v981 = vadd.f32 0.0, %v980
    %v982 = vpop.f32.mrb[0].mxu0
    %983 = vmatprep.mubr.bf16.mxu0 %v273
    %984 = vmatmul.mubr.bf16.gmra.mrb[0].mxu0 %v272
    %v985 = vpop.f32.mrb[0].mxu0
    %v986 = vadd.f32 0.0, %v985
    %v987 = vpop.f32.mrb[0].mxu0
    %v988 = vpop.f32.mrb[0].mxu0
    %v989 = vadd.f32 0.0, %v988
    %v990 = vpop.f32.mrb[0].mxu0
    %991 = vmatprep.mubr.bf16.mxu0 %v275
    %992 = vmatmul.mubr.bf16.gmra.mrb[0].mxu0 %v274
    %v993 = vpop.f32.mrb[0].mxu0
    %v994 = vadd.f32 0.0, %v993
    %v995 = vpop.f32.mrb[0].mxu0
    %v996 = vpop.f32.mrb[0].mxu0
    %v997 = vadd.f32 0.0, %v996
    %v998 = vpop.f32.mrb[0].mxu0
    %999 = vmatprep.mubr.bf16.mxu0 %v277
    %1000 = vmatmul.mubr.bf16.gmra.mrb[0].mxu0 %v276
    %v1001 = vpop.f32.mrb[0].mxu0
    %v1002 = vadd.f32 0.0, %v1001
    %v1003 = vpop.f32.mrb[0].mxu0
    %v1004 = vpop.f32.mrb[0].mxu0
    %v1005 = vadd.f32 0.0, %v1004
    %v1006 = vpop.f32.mrb[0].mxu0
    %1007 = vmatprep.mubr.bf16.mxu0 %v279
    %1008 = vmatmul.mubr.bf16.gmra.mrb[0].mxu0 %v278
    %v1009 = vpop.f32.mrb[0].mxu0
    %v1010 = vadd.f32 0.0, %v1009
    %v1011 = vpop.f32.mrb[0].mxu0
    %v1012 = vpop.f32.mrb[0].mxu0
    %v1013 = vadd.f32 0.0, %v1012
    %v1014 = vpop.f32.mrb[0].mxu0
    %1015 = vmatprep.mubr.bf16.mxu0 %v281
    %1016 = vmatmul.mubr.bf16.gmra.mrb[0].mxu0 %v280
    %v1017 = vpop.f32.mrb[0].mxu0
    %v1018 = vadd.f32 0.0, %v1017
    %v1019 = vpop.f32.mrb[0].mxu0
    %v1020 = vpop.f32.mrb[0].mxu0
    %v1021 = vadd.f32 0.0, %v1020
    %v1022 = vpop.f32.mrb[0].mxu0
    %1023 = vmatprep.mubr.bf16.mxu0 %v283
    %1024 = vmatmul.mubr.bf16.gmra.mrb[0].mxu0 %v282
    %v1025 = vpop.f32.mrb[0].mxu0
    %v1026 = vadd.f32 0.0, %v1025
    %v1027 = vpop.f32.mrb[0].mxu0
    %v1028 = vpop.f32.mrb[0].mxu0
    %v1029 = vadd.f32 0.0, %v1028
    %v1030 = vpop.f32.mrb[0].mxu0
    %1031 = vdwg.mxu0
    %v1032 = vpack.c.bf16 %v909, %v906
    %v1033 = vpack.c.bf16 %v917, %v914
    %v1034 = vpack.c.bf16 %v925, %v922
    %v1035 = vpack.c.bf16 %v933, %v930
    %v1036 = vpack.c.bf16 %v941, %v938
    %v1037 = vpack.c.bf16 %v949, %v946
    %v1038 = vpack.c.bf16 %v957, %v954
    %v1039 = vpack.c.bf16 %v965, %v962
    %v1040 = vpack.c.bf16 %v973, %v970
    %v1041 = vpack.c.bf16 %v981, %v978
    %v1042 = vpack.c.bf16 %v989, %v986
    %v1043 = vpack.c.bf16 %v997, %v994
    %v1044 = vpack.c.bf16 %v1005, %v1002
    %v1045 = vpack.c.bf16 %v1013, %v1010
    %v1046 = vpack.c.bf16 %v1021, %v1018
    %v1047 = vpack.c.bf16 %v1029, %v1026
    %v1049 = vlaneseq
    %v1050 = vshrl.u32 %v1049, 7
    %v1051 = vsub.s32 0, %v1050
    %v1052 = vrot.slane %v870, %v1051
    %v1070 = vunpack.c.l.b16 %v853
    %v1071 = vunpack.c.l.b16 %v854
    %v1072 = vunpack.c.l.b16 %v855
    %v1073 = vunpack.c.l.b16 %v856
    %v1074 = vunpack.c.l.b16 %v857
    %v1075 = vunpack.c.l.b16 %v858
    %v1076 = vunpack.c.l.b16 %v859
    %v1077 = vunpack.c.l.b16 %v860
    %v1078 = vunpack.c.l.b16 %v861
    %v1079 = vunpack.c.l.b16 %v862
    %v1080 = vunpack.c.l.b16 %v863
    %v1081 = vunpack.c.l.b16 %v864
    %v1082 = vunpack.c.l.b16 %v865
    %v1083 = vunpack.c.l.b16 %v866
    %v1084 = vunpack.c.l.b16 %v867
    %v1085 = vunpack.c.l.b16 %v868
    %v1086 = vpack.c.b16 %v1071, %v1070
    %v1087 = vpack.c.b16 %v1073, %v1072
    %v1088 = vpack.c.b16 %v1075, %v1074
    %v1089 = vpack.c.b16 %v1077, %v1076
    %v1090 = vpack.c.b16 %v1079, %v1078
    %v1091 = vpack.c.b16 %v1081, %v1080
    %v1092 = vpack.c.b16 %v1083, %v1082
    %v1093 = vpack.c.b16 %v1085, %v1084
    %1102 = vmatprep.subr.bf16.mxu0 0
    %1103 = vmatpush1.bf16.msra.mxu0 %v1086
    %1104 = vmatprep.subr.bf16.mxu0 0
    %1105 = vmatpush1.bf16.msra.mxu0 %v1087
    %1106 = vmatprep.subr.bf16.mxu0 0
    %1107 = vmatpush1.bf16.msra.mxu0 %v1088
    %1108 = vmatprep.subr.bf16.mxu0 0
    %1109 = vmatpush1.bf16.msra.mxu0 %v1089
    %1110 = vmatprep.subr.bf16.mxu0 0
    %1111 = vmatpush1.bf16.msra.mxu0 %v1090
    %1112 = vmatprep.subr.bf16.mxu0 0
    %1113 = vmatpush1.bf16.msra.mxu0 %v1091
    %1114 = vmatprep.subr.bf16.mxu0 0
    %1115 = vmatpush1.bf16.msra.mxu0 %v1092
    %1116 = vmatprep.subr.bf16.mxu0 0
    %1117 = vmatpush1.bf16.msra.mxu0 %v1093
    %1118 = vmatprep.subr.bf16.mxu0 0
    %1119 = vmatpush1.bf16.msra.mxu0 0
    %1120 = vmatprep.subr.bf16.mxu0 0
    %1121 = vmatpush1.bf16.msra.mxu0 0
    %1122 = vmatprep.subr.bf16.mxu0 0
    %1123 = vmatpush1.bf16.msra.mxu0 0
    %1124 = vmatprep.subr.bf16.mxu0 0
    %1125 = vmatpush1.bf16.msra.mxu0 0
    %1126 = vmatprep.subr.bf16.mxu0 0
    %1127 = vmatpush1.bf16.msra.mxu0 0
    %1128 = vmatprep.subr.bf16.mxu0 0
    %1129 = vmatpush1.bf16.msra.mxu0 0
    %1130 = vmatprep.subr.bf16.mxu0 0
    %1131 = vmatpush1.bf16.msra.mxu0 0
    %1132 = vmatprep.subr.bf16.mxu0 0
    %1133 = vmatpush1.bf16.msra.mxu0 0
    %1134 = vmatprep.mubr.bf16.mxu0 0
    %1135 = vmatmul.mubr.bf16.gmra.mrb[0].mxu0 %v1032
    %v1136 = vpop.f32.mrb[0].mxu0
    %v1137 = vadd.f32 %v1052, %v1136
    %v1138 = vpop.f32.mrb[0].mxu0
    %v1139 = vpop.f32.mrb[0].mxu0
    %v1140 = vadd.f32 %v1052, %v1139
    %v1141 = vpop.f32.mrb[0].mxu0
    %1142 = vmatprep.mubr.bf16.mxu0 0
    %1143 = vmatmul.mubr.bf16.gmra.mrb[0].mxu0 %v1033
    %v1144 = vpop.f32.mrb[0].mxu0
    %v1145 = vadd.f32 %v1052, %v1144
    %v1146 = vpop.f32.mrb[0].mxu0
    %v1147 = vpop.f32.mrb[0].mxu0
    %v1148 = vadd.f32 %v1052, %v1147
    %v1149 = vpop.f32.mrb[0].mxu0
    %1150 = vmatprep.mubr.bf16.mxu0 0
    %1151 = vmatmul.mubr.bf16.gmra.mrb[0].mxu0 %v1034
    %v1152 = vpop.f32.mrb[0].mxu0
    %v1153 = vadd.f32 %v1052, %v1152
    %v1154 = vpop.f32.mrb[0].mxu0
    %v1155 = vpop.f32.mrb[0].mxu0
    %v1156 = vadd.f32 %v1052, %v1155
    %v1157 = vpop.f32.mrb[0].mxu0
    %1158 = vmatprep.mubr.bf16.mxu0 0
    %1159 = vmatmul.mubr.bf16.gmra.mrb[0].mxu0 %v1035
    %v1160 = vpop.f32.mrb[0].mxu0
    %v1161 = vadd.f32 %v1052, %v1160
    %v1162 = vpop.f32.mrb[0].mxu0
    %v1163 = vpop.f32.mrb[0].mxu0
    %v1164 = vadd.f32 %v1052, %v1163
    %v1165 = vpop.f32.mrb[0].mxu0
    %1166 = vmatprep.mubr.bf16.mxu0 0
    %1167 = vmatmul.mubr.bf16.gmra.mrb[0].mxu0 %v1036
    %v1168 = vpop.f32.mrb[0].mxu0
    %v1169 = vadd.f32 %v1052, %v1168
    %v1170 = vpop.f32.mrb[0].mxu0
    %v1171 = vpop.f32.mrb[0].mxu0
    %v1172 = vadd.f32 %v1052, %v1171
    %v1173 = vpop.f32.mrb[0].mxu0
    %1174 = vmatprep.mubr.bf16.mxu0 0
    %1175 = vmatmul.mubr.bf16.gmra.mrb[0].mxu0 %v1037
    %v1176 = vpop.f32.mrb[0].mxu0
    %v1177 = vadd.f32 %v1052, %v1176
    %v1178 = vpop.f32.mrb[0].mxu0
    %v1179 = vpop.f32.mrb[0].mxu0
    %v1180 = vadd.f32 %v1052, %v1179
    %v1181 = vpop.f32.mrb[0].mxu0
    %1182 = vmatprep.mubr.bf16.mxu0 0
    %1183 = vmatmul.mubr.bf16.gmra.mrb[0].mxu0 %v1038
    %v1184 = vpop.f32.mrb[0].mxu0
    %v1185 = vadd.f32 %v1052, %v1184
    %v1186 = vpop.f32.mrb[0].mxu0
    %v1187 = vpop.f32.mrb[0].mxu0
    %v1188 = vadd.f32 %v1052, %v1187
    %v1189 = vpop.f32.mrb[0].mxu0
    %1190 = vmatprep.mubr.bf16.mxu0 0
    %1191 = vmatmul.mubr.bf16.gmra.mrb[0].mxu0 %v1039
    %v1192 = vpop.f32.mrb[0].mxu0
    %v1193 = vadd.f32 %v1052, %v1192
    %v1194 = vpop.f32.mrb[0].mxu0
    %v1195 = vpop.f32.mrb[0].mxu0
    %v1196 = vadd.f32 %v1052, %v1195
    %v1197 = vpop.f32.mrb[0].mxu0
    %1198 = vmatprep.mubr.bf16.mxu0 0
    %1199 = vmatmul.mubr.bf16.gmra.mrb[0].mxu0 %v1040
    %v1200 = vpop.f32.mrb[0].mxu0
    %v1201 = vadd.f32 %v1052, %v1200
    %v1202 = vpop.f32.mrb[0].mxu0
    %v1203 = vpop.f32.mrb[0].mxu0
    %v1204 = vadd.f32 %v1052, %v1203
    %v1205 = vpop.f32.mrb[0].mxu0
    %1206 = vmatprep.mubr.bf16.mxu0 0
    %1207 = vmatmul.mubr.bf16.gmra.mrb[0].mxu0 %v1041
    %v1208 = vpop.f32.mrb[0].mxu0
    %v1209 = vadd.f32 %v1052, %v1208
    %v1210 = vpop.f32.mrb[0].mxu0
    %v1211 = vpop.f32.mrb[0].mxu0
    %v1212 = vadd.f32 %v1052, %v1211
    %v1213 = vpop.f32.mrb[0].mxu0
    %1214 = vmatprep.mubr.bf16.mxu0 0
    %1215 = vmatmul.mubr.bf16.gmra.mrb[0].mxu0 %v1042
    %v1216 = vpop.f32.mrb[0].mxu0
    %v1217 = vadd.f32 %v1052, %v1216
    %v1218 = vpop.f32.mrb[0].mxu0
    %v1219 = vpop.f32.mrb[0].mxu0
    %v1220 = vadd.f32 %v1052, %v1219
    %v1221 = vpop.f32.mrb[0].mxu0
    %1222 = vmatprep.mubr.bf16.mxu0 0
    %1223 = vmatmul.mubr.bf16.gmra.mrb[0].mxu0 %v1043
    %v1224 = vpop.f32.mrb[0].mxu0
    %v1225 = vadd.f32 %v1052, %v1224
    %v1226 = vpop.f32.mrb[0].mxu0
    %v1227 = vpop.f32.mrb[0].mxu0
    %v1228 = vadd.f32 %v1052, %v1227
    %v1229 = vpop.f32.mrb[0].mxu0
    %1230 = vmatprep.mubr.bf16.mxu0 0
    %1231 = vmatmul.mubr.bf16.gmra.mrb[0].mxu0 %v1044
    %v1232 = vpop.f32.mrb[0].mxu0
    %v1233 = vadd.f32 %v1052, %v1232
    %v1234 = vpop.f32.mrb[0].mxu0
    %v1235 = vpop.f32.mrb[0].mxu0
    %v1236 = vadd.f32 %v1052, %v1235
    %v1237 = vpop.f32.mrb[0].mxu0
    %1238 = vmatprep.mubr.bf16.mxu0 0
    %1239 = vmatmul.mubr.bf16.gmra.mrb[0].mxu0 %v1045
    %v1240 = vpop.f32.mrb[0].mxu0
    %v1241 = vadd.f32 %v1052, %v1240
    %v1242 = vpop.f32.mrb[0].mxu0
    %v1243 = vpop.f32.mrb[0].mxu0
    %v1244 = vadd.f32 %v1052, %v1243
    %v1245 = vpop.f32.mrb[0].mxu0
    %1246 = vmatprep.mubr.bf16.mxu0 0
    %1247 = vmatmul.mubr.bf16.gmra.mrb[0].mxu0 %v1046
    %v1248 = vpop.f32.mrb[0].mxu0
    %v1249 = vadd.f32 %v1052, %v1248
    %v1250 = vpop.f32.mrb[0].mxu0
    %v1251 = vpop.f32.mrb[0].mxu0
    %v1252 = vadd.f32 %v1052, %v1251
    %v1253 = vpop.f32.mrb[0].mxu0
    %1254 = vmatprep.mubr.bf16.mxu0 0
    %1255 = vmatmul.mubr.bf16.gmra.mrb[0].mxu0 %v1047
    %v1256 = vpop.f32.mrb[0].mxu0
    %v1257 = vadd.f32 %v1052, %v1256
    %v1258 = vpop.f32.mrb[0].mxu0
    %v1259 = vpop.f32.mrb[0].mxu0
    %v1260 = vadd.f32 %v1052, %v1259
    %v1261 = vpop.f32.mrb[0].mxu0
    %1262 = vdwg.mxu0
    %v1263 = vmax.f32 %v1137, 0.0
    %v1264 = vmax.f32 %v1140, 0.0
    %v1265 = vmax.f32 %v1145, 0.0
    %v1266 = vmax.f32 %v1148, 0.0
    %v1267 = vmax.f32 %v1153, 0.0
    %v1268 = vmax.f32 %v1156, 0.0
    %v1269 = vmax.f32 %v1161, 0.0
    %v1270 = vmax.f32 %v1164, 0.0
    %v1271 = vmax.f32 %v1169, 0.0
    %v1272 = vmax.f32 %v1172, 0.0
    %v1273 = vmax.f32 %v1177, 0.0
    %v1274 = vmax.f32 %v1180, 0.0
    %v1275 = vmax.f32 %v1185, 0.0
    %v1276 = vmax.f32 %v1188, 0.0
    %v1277 = vmax.f32 %v1193, 0.0
    %v1278 = vmax.f32 %v1196, 0.0
    %v1279 = vmax.f32 %v1201, 0.0
    %v1280 = vmax.f32 %v1204, 0.0
    %v1281 = vmax.f32 %v1209, 0.0
    %v1282 = vmax.f32 %v1212, 0.0
    %v1283 = vmax.f32 %v1217, 0.0
    %v1284 = vmax.f32 %v1220, 0.0
    %v1285 = vmax.f32 %v1225, 0.0
    %v1286 = vmax.f32 %v1228, 0.0
    %v1287 = vmax.f32 %v1233, 0.0
    %v1288 = vmax.f32 %v1236, 0.0
    %v1289 = vmax.f32 %v1241, 0.0
    %v1290 = vmax.f32 %v1244, 0.0
    %v1291 = vmax.f32 %v1249, 0.0
    %v1292 = vmax.f32 %v1252, 0.0
    %v1293 = vmax.f32 %v1257, 0.0
    %v1294 = vmax.f32 %v1260, 0.0
    %v1295 = vpack.c.bf16 %v1264, %v1263
    %v1296 = vpack.c.bf16 %v1266, %v1265
    %v1297 = vpack.c.bf16 %v1268, %v1267
    %v1298 = vpack.c.bf16 %v1270, %v1269
    %v1299 = vpack.c.bf16 %v1272, %v1271
    %v1300 = vpack.c.bf16 %v1274, %v1273
    %v1301 = vpack.c.bf16 %v1276, %v1275
    %v1302 = vpack.c.bf16 %v1278, %v1277
    %v1303 = vpack.c.bf16 %v1280, %v1279
    %v1304 = vpack.c.bf16 %v1282, %v1281
    %v1305 = vpack.c.bf16 %v1284, %v1283
    %v1306 = vpack.c.bf16 %v1286, %v1285
    %v1307 = vpack.c.bf16 %v1288, %v1287
    %v1308 = vpack.c.bf16 %v1290, %v1289
    %v1309 = vpack.c.bf16 %v1292, %v1291
    %v1310 = vpack.c.bf16 %v1294, %v1293
    %v1311 = vld [vmem:[#allocation7] sm:$0xff]
    %v1313 = vunpack.c.l.b16 %v1311
    %v1314 = vunpack.c.h.b16 %v1311
    %v1315 = vpack.c.b16 %v1313, %v1313
    %v1316 = vpack.c.b16 %v1314, %v1314
    %1319 = vmatprep.subr.bf16.mxu0 0
    %1320 = vmatpush1.bf16.msra.mxu0 %v1295
    %1321 = vmatprep.subr.bf16.mxu0 0
    %1322 = vmatpush1.bf16.msra.mxu0 %v1296
    %1323 = vmatprep.subr.bf16.mxu0 0
    %1324 = vmatpush1.bf16.msra.mxu0 %v1297
    %1325 = vmatprep.subr.bf16.mxu0 0
    %1326 = vmatpush1.bf16.msra.mxu0 %v1298
    %1327 = vmatprep.subr.bf16.mxu0 0
    %1328 = vmatpush1.bf16.msra.mxu0 %v1299
    %1329 = vmatprep.subr.bf16.mxu0 0
    %1330 = vmatpush1.bf16.msra.mxu0 %v1300
    %1331 = vmatprep.subr.bf16.mxu0 0
    %1332 = vmatpush1.bf16.msra.mxu0 %v1301
    %1333 = vmatprep.subr.bf16.mxu0 0
    %1334 = vmatpush1.bf16.msra.mxu0 %v1302
    %1335 = vmatprep.subr.bf16.mxu0 0
    %1336 = vmatpush1.bf16.msra.mxu0 %v1303
    %1337 = vmatprep.subr.bf16.mxu0 0
    %1338 = vmatpush1.bf16.msra.mxu0 %v1304
    %1339 = vmatprep.subr.bf16.mxu0 0
    %1340 = vmatpush1.bf16.msra.mxu0 %v1305
    %1341 = vmatprep.subr.bf16.mxu0 0
    %1342 = vmatpush1.bf16.msra.mxu0 %v1306
    %1343 = vmatprep.subr.bf16.mxu0 0
    %1344 = vmatpush1.bf16.msra.mxu0 %v1307
    %1345 = vmatprep.subr.bf16.mxu0 0
    %1346 = vmatpush1.bf16.msra.mxu0 %v1308
    %1347 = vmatprep.subr.bf16.mxu0 0
    %1348 = vmatpush1.bf16.msra.mxu0 %v1309
    %1349 = vmatprep.subr.bf16.mxu0 0
    %1350 = vmatpush1.bf16.msra.mxu0 %v1310
    %1351 = vmatprep.mubr.bf16.mxu0 %v1316
    %1352 = vmatmul.mubr.bf16.gmra.mrb[0].mxu0 %v1315
    %v1353 = vpop.f32.mrb[0].mxu0
    %v1354 = vadd.f32 0.0, %v1353
    %v1355 = vpop.f32.mrb[0].mxu0
    %v1356 = vpop.f32.mrb[0].mxu0
    %v1357 = vpop.f32.mrb[0].mxu0
    %1358 = vdwg.mxu0
    %s1359 = scalar_lea.vmem [#allocation8], 128
    %v1360 = vld [vmem:[%s1359] sm:$0xf]
    %v1361 = vld [vmem:[%s1359 + $0x4] sm:$0xf]
    %v1362 = vld [vmem:[%s1359 + $0x8] sm:$0xf]
    %v1363 = vld [vmem:[%s1359 + $0xc] sm:$0xf]
    %v1364 = vld [vmem:[%s1359 + $0x10] sm:$0xf]
    %v1365 = vld [vmem:[%s1359 + $0x14] sm:$0xf]
    %v1366 = vld [vmem:[%s1359 + $0x18] sm:$0xf]
    %v1367 = vld [vmem:[%s1359 + $0x1c] sm:$0xf]
    %v1368 = vld [vmem:[%s1359 + $0x20] sm:$0xf]
    %v1369 = vld [vmem:[%s1359 + $0x24] sm:$0xf]
    %v1370 = vld [vmem:[%s1359 + $0x28] sm:$0xf]
    %v1371 = vld [vmem:[%s1359 + $0x2c] sm:$0xf]
    %v1372 = vld [vmem:[%s1359 + $0x30] sm:$0xf]
    %v1373 = vld [vmem:[%s1359 + $0x34] sm:$0xf]
    %v1374 = vld [vmem:[%s1359 + $0x38] sm:$0xf]
    %v1375 = vld [vmem:[%s1359 + $0x3c] sm:$0xf]
    %s1376 = scalar_lea.vmem %s4, 2
    %v1377 = vld [vmem:[%s1376] sm:$0x1]
    %v1378 = vpack.c.bf16 %v1354, %v1354
    %v1380 = vlaneseq
    %v1381 = vshrl.u32 %v1380, 7
    %v1382 = vsub.s32 0, %v1381
    %v1383 = vrot.slane %v1377, %v1382
    %v1401 = vunpack.c.l.b16 %v1360
    %v1402 = vunpack.c.l.b16 %v1361
    %v1403 = vunpack.c.l.b16 %v1362
    %v1404 = vunpack.c.l.b16 %v1363
    %v1405 = vunpack.c.l.b16 %v1364
    %v1406 = vunpack.c.l.b16 %v1365
    %v1407 = vunpack.c.l.b16 %v1366
    %v1408 = vunpack.c.l.b16 %v1367
    %v1409 = vunpack.c.l.b16 %v1368
    %v1410 = vunpack.c.l.b16 %v1369
    %v1411 = vunpack.c.l.b16 %v1370
    %v1412 = vunpack.c.l.b16 %v1371
    %v1413 = vunpack.c.l.b16 %v1372
    %v1414 = vunpack.c.l.b16 %v1373
    %v1415 = vunpack.c.l.b16 %v1374
    %v1416 = vunpack.c.l.b16 %v1375
    %v1417 = vpack.c.b16 %v1402, %v1401
    %v1418 = vpack.c.b16 %v1404, %v1403
    %v1419 = vpack.c.b16 %v1406, %v1405
    %v1420 = vpack.c.b16 %v1408, %v1407
    %v1421 = vpack.c.b16 %v1410, %v1409
    %v1422 = vpack.c.b16 %v1412, %v1411
    %v1423 = vpack.c.b16 %v1414, %v1413
    %v1424 = vpack.c.b16 %v1416, %v1415
    %1433 = vmatprep.subr.bf16.mxu0 0
    %1434 = vmatpush1.bf16.msra.mxu0 %v1417
    %1435 = vmatprep.subr.bf16.mxu0 0
    %1436 = vmatpush1.bf16.msra.mxu0 %v1418
    %1437 = vmatprep.subr.bf16.mxu0 0
    %1438 = vmatpush1.bf16.msra.mxu0 %v1419
    %1439 = vmatprep.subr.bf16.mxu0 0
    %1440 = vmatpush1.bf16.msra.mxu0 %v1420
    %1441 = vmatprep.subr.bf16.mxu0 0
    %1442 = vmatpush1.bf16.msra.mxu0 %v1421
    %1443 = vmatprep.subr.bf16.mxu0 0
    %1444 = vmatpush1.bf16.msra.mxu0 %v1422
    %1445 = vmatprep.subr.bf16.mxu0 0
    %1446 = vmatpush1.bf16.msra.mxu0 %v1423
    %1447 = vmatprep.subr.bf16.mxu0 0
    %1448 = vmatpush1.bf16.msra.mxu0 %v1424
    %1449 = vmatprep.subr.bf16.mxu0 0
    %1450 = vmatpush1.bf16.msra.mxu0 0
    %1451 = vmatprep.subr.bf16.mxu0 0
    %1452 = vmatpush1.bf16.msra.mxu0 0
    %1453 = vmatprep.subr.bf16.mxu0 0
    %1454 = vmatpush1.bf16.msra.mxu0 0
    %1455 = vmatprep.subr.bf16.mxu0 0
    %1456 = vmatpush1.bf16.msra.mxu0 0
    %1457 = vmatprep.subr.bf16.mxu0 0
    %1458 = vmatpush1.bf16.msra.mxu0 0
    %1459 = vmatprep.subr.bf16.mxu0 0
    %1460 = vmatpush1.bf16.msra.mxu0 0
    %1461 = vmatprep.subr.bf16.mxu0 0
    %1462 = vmatpush1.bf16.msra.mxu0 0
    %1463 = vmatprep.subr.bf16.mxu0 0
    %1464 = vmatpush1.bf16.msra.mxu0 0
    %1465 = vmatprep.mubr.bf16.mxu0 0
    %1466 = vmatmul.mubr.bf16.gmra.mrb[0].mxu0 %v1378
    %v1467 = vpop.f32.mrb[0].mxu0
    %v1468 = vadd.f32 %v1383, %v1467
    %v1469 = vpop.f32.mrb[0].mxu0
    %v1470 = vpop.f32.mrb[0].mxu0
    %v1471 = vpop.f32.mrb[0].mxu0
    %1472 = vdwg.mxu0
    %s1473 = scalar_lea.vmem [#allocation8], 192
    %v1474 = vld [vmem:[%s1473] sm:$0xf]
    %v1475 = vld [vmem:[%s1473 + $0x4] sm:$0xf]
    %v1476 = vld [vmem:[%s1473 + $0x8] sm:$0xf]
    %v1477 = vld [vmem:[%s1473 + $0xc] sm:$0xf]
    %v1478 = vld [vmem:[%s1473 + $0x10] sm:$0xf]
    %v1479 = vld [vmem:[%s1473 + $0x14] sm:$0xf]
    %v1480 = vld [vmem:[%s1473 + $0x18] sm:$0xf]
    %v1481 = vld [vmem:[%s1473 + $0x1c] sm:$0xf]
    %v1482 = vld [vmem:[%s1473 + $0x20] sm:$0xf]
    %v1483 = vld [vmem:[%s1473 + $0x24] sm:$0xf]
    %v1484 = vld [vmem:[%s1473 + $0x28] sm:$0xf]
    %v1485 = vld [vmem:[%s1473 + $0x2c] sm:$0xf]
    %v1486 = vld [vmem:[%s1473 + $0x30] sm:$0xf]
    %v1487 = vld [vmem:[%s1473 + $0x34] sm:$0xf]
    %v1488 = vld [vmem:[%s1473 + $0x38] sm:$0xf]
    %v1489 = vld [vmem:[%s1473 + $0x3c] sm:$0xf]
    %s1490 = scalar_lea.vmem %s4, 3
    %v1491 = vld [vmem:[%s1490] sm:$0x1]
    %v1492 = vpack.c.bf16 %v1468, %v1468
    %v1494 = vlaneseq
    %v1495 = vshrl.u32 %v1494, 7
    %v1496 = vsub.s32 0, %v1495
    %v1497 = vrot.slane %v1491, %v1496
    %v1515 = vunpack.c.l.b16 %v1474
    %v1516 = vunpack.c.l.b16 %v1475
    %v1517 = vunpack.c.l.b16 %v1476
    %v1518 = vunpack.c.l.b16 %v1477
    %v1519 = vunpack.c.l.b16 %v1478
    %v1520 = vunpack.c.l.b16 %v1479
    %v1521 = vunpack.c.l.b16 %v1480
    %v1522 = vunpack.c.l.b16 %v1481
    %v1523 = vunpack.c.l.b16 %v1482
    %v1524 = vunpack.c.l.b16 %v1483
    %v1525 = vunpack.c.l.b16 %v1484
    %v1526 = vunpack.c.l.b16 %v1485
    %v1527 = vunpack.c.l.b16 %v1486
    %v1528 = vunpack.c.l.b16 %v1487
    %v1529 = vunpack.c.l.b16 %v1488
    %v1530 = vunpack.c.l.b16 %v1489
    %v1531 = vpack.c.b16 %v1516, %v1515
    %v1532 = vpack.c.b16 %v1518, %v1517
    %v1533 = vpack.c.b16 %v1520, %v1519
    %v1534 = vpack.c.b16 %v1522, %v1521
    %v1535 = vpack.c.b16 %v1524, %v1523
    %v1536 = vpack.c.b16 %v1526, %v1525
    %v1537 = vpack.c.b16 %v1528, %v1527
    %v1538 = vpack.c.b16 %v1530, %v1529
    %1547 = vmatprep.subr.bf16.mxu0 0
    %1548 = vmatpush1.bf16.msra.mxu0 %v1531
    %1549 = vmatprep.subr.bf16.mxu0 0
    %1550 = vmatpush1.bf16.msra.mxu0 %v1532
    %1551 = vmatprep.subr.bf16.mxu0 0
    %1552 = vmatpush1.bf16.msra.mxu0 %v1533
    %1553 = vmatprep.subr.bf16.mxu0 0
    %1554 = vmatpush1.bf16.msra.mxu0 %v1534
    %1555 = vmatprep.subr.bf16.mxu0 0
    %1556 = vmatpush1.bf16.msra.mxu0 %v1535
    %1557 = vmatprep.subr.bf16.mxu0 0
    %1558 = vmatpush1.bf16.msra.mxu0 %v1536
    %1559 = vmatprep.subr.bf16.mxu0 0
    %1560 = vmatpush1.bf16.msra.mxu0 %v1537
    %1561 = vmatprep.subr.bf16.mxu0 0
    %1562 = vmatpush1.bf16.msra.mxu0 %v1538
    %1563 = vmatprep.subr.bf16.mxu0 0
    %1564 = vmatpush1.bf16.msra.mxu0 0
    %1565 = vmatprep.subr.bf16.mxu0 0
    %1566 = vmatpush1.bf16.msra.mxu0 0
    %1567 = vmatprep.subr.bf16.mxu0 0
    %1568 = vmatpush1.bf16.msra.mxu0 0
    %1569 = vmatprep.subr.bf16.mxu0 0
    %1570 = vmatpush1.bf16.msra.mxu0 0
    %1571 = vmatprep.subr.bf16.mxu0 0
    %1572 = vmatpush1.bf16.msra.mxu0 0
    %1573 = vmatprep.subr.bf16.mxu0 0
    %1574 = vmatpush1.bf16.msra.mxu0 0
    %1575 = vmatprep.subr.bf16.mxu0 0
    %1576 = vmatpush1.bf16.msra.mxu0 0
    %1577 = vmatprep.subr.bf16.mxu0 0
    %1578 = vmatpush1.bf16.msra.mxu0 0
    %1579 = vmatprep.mubr.bf16.mxu0 0
    %1580 = vmatmul.mubr.bf16.gmra.mrb[0].mxu0 %v1492
    %v1581 = vpop.f32.mrb[0].mxu0
    %v1582 = vadd.f32 %v1497, %v1581
    %v1583 = vpop.f32.mrb[0].mxu0
    %v1584 = vpop.f32.mrb[0].mxu0
    %v1585 = vpop.f32.mrb[0].mxu0
    %1586 = vdwg.mxu0
    %v1587 = vlaneseq
    %v1588 = vand.u32 %v1587, 127
    %vm1589 = vcmp.lt.s32.totalorder %v1588, 4
    %v1590 = vsel %vm1589, %v1582, -inf
    %1591 = vmax.xlane.f32.xlu0 %v1590
    %v1592 = vpop.xlane.xlu0 %1591
    %v1593 = vsub.f32 %v1590, %v1592
    %v1594 = vmul.f32 %v1593, 1.442695
    %v1595 = vpow.pop %v1594
    %1596 = vadd.xlane.f32.xlu0 %v1595
    %v1597 = vpop.xlane.xlu0 %1596
    %v1598 = vrcp.pop %v1597
    %v1599 = vmul.f32 %v1595, %v1598
    %1600 = vst [vmem:[#allocation10] sm:$0xff] %v1599
    // Predicated region
    $region38: #{tpu_custom_call.1} parent=1 // pred_check
      _
    $region39: #{tpu_custom_call.1} parent=1 // pred_check_branch
      %1602 = sbr.rel (0) target = $region41
    $region40: #{tpu_custom_call.1} parent=1 // pred_region
      %s1604 = ssub.s32 128, 128
      %1605 = vsyncadd [#allocation4], %s1604
      %s1607 = sshll.u32 [#allocation10], 4
      %s1608 = int_to_ptr.vmem [resolvable:$true] %s1607
      %1610 = dma.vmem_to_hbm [thread:$0]  %s1608, 128, %s5, [#allocation4]
    $region41: #{tpu_custom_call.1} parent=1 // pred_fallthru
      _
    // Predicated region
    $region42: #{tpu_custom_call.1} parent=1 // pred_check
      _
    $region43: #{tpu_custom_call.1} parent=1 // pred_check_branch
      %1612 = sbr.rel (0) target = $region45
    $region44: #{tpu_custom_call.1} parent=1 // pred_region
      %1613 = dma.done [#allocation4], 128
    $region45: #{tpu_custom_call.1} parent=1 // pred_fallthru
      _
    %1614 = vsyncpa [#allocation3], 1
    %1615 = vsyncpa [#allocation6], 1
    %1616 = vsyncpa [#allocation9], 1
    %1617 = vsyncpa [#allocation4], 1

</llo_original>
